<compile_context>
chip_gen: v6e
topology: v6e:2x2x1
jax: 0.10.0
libtpu: 0.0.40
codegen_flags: <defaults>
</compile_context>

<pallas_src>
import jax
import jax.numpy as jnp
from jax.experimental import pallas as pl
from jax.experimental.pallas import tpu as pltpu

CHUNK = 512  # batch rows (lanes) per unrolled inner chunk: intermediates fit in vregs


def _round_up(v, m):
    return ((v + m - 1) // m) * m


def _linear_fm(h, wt_ref, acc0):
    """Feature-major linear layer on the VPU (exact f32).

    h      : (k_in, chunk) value  -- activations, batch on lanes.
    wt_ref : (n_out, k_in) Ref    -- nn.Linear-native (out, in) weights.
    acc0   : (n_out, chunk) value -- bias already lane-broadcast (hoisted out of loops).
    Returns (n_out, chunk) = W @ h + b.
    """
    acc = acc0
    for k in range(wt_ref.shape[1]):  # tiny static trip count (3 or 10), fully unrolled
        acc = acc + wt_ref[:, k:k + 1] * h[k:k + 1, :]
    return acc


def _make_kernel(chunk, reduce_head):
    def kernel(x_ref, w1_ref, b1_ref, w2_ref, b2_ref,
               w3_ref, b3_ref, w4_ref, b4_ref, o_ref):
        tb = x_ref.shape[1]
        n_chunks = tb // chunk
        # Hoist bias lane-broadcasts out of the chunk loop (JAX does not CSE
        # broadcast_in_dim; redoing them per chunk would repeat the XLU work).
        b1 = jnp.broadcast_to(b1_ref[...], (b1_ref.shape[0], chunk))
        b2 = jnp.broadcast_to(b2_ref[...], (b2_ref.shape[0], chunk))
        b3 = jnp.broadcast_to(b3_ref[...], (b3_ref.shape[0], chunk))
        if reduce_head:
            w4 = w4_ref[...]          # (hidden, 1) column
            b4 = b4_ref[...]          # (1, 1)
        else:
            b4 = jnp.broadcast_to(b4_ref[...], (b4_ref.shape[0], chunk))

        for c in range(n_chunks):     # static unroll; all offsets are compile-time
            lo = c * chunk
            h = x_ref[:, lo:lo + chunk]                          # (in_dim, chunk)
            h = jnp.maximum(_linear_fm(h, w1_ref, b1), 0.0)      # Linear + ReLU
            h = jnp.maximum(_linear_fm(h, w2_ref, b2), 0.0)      # Linear + ReLU
            h = jnp.maximum(_linear_fm(h, w3_ref, b3), 0.0)      # Linear + ReLU
            if reduce_head:
                # Final Linear (single logit): multiply + sublane reduce (XLU has
                # slack), stored as a lane-dense (1, chunk) slab -> unmasked stores.
                o_ref[:, lo:lo + chunk] = (
                    jnp.sum(h * w4, axis=0, keepdims=True) + b4)
            else:
                o_ref[:, lo:lo + chunk] = _linear_fm(h, w4_ref, b4)
    return kernel


def neural_network_forward(x, params, *, block_batch=8192):
    """x: (B, input_size) f32. params: 4x (W, b) with W (in, out), b (1, out)."""
    (w1, b1), (w2, b2), (w3, b3), (w4, b4) = params
    x = x.astype(jnp.float32)
    B, in_dim = x.shape
    num_outputs = w4.shape[1]

    # Batch tile: multiple of CHUNK, big enough to amortize per-step overhead, tiny in
    # VMEM (feature-major blocks are (in_dim, tb) and (num_outputs, tb)).
    tb = max(CHUNK, min(_round_up(block_batch, CHUNK), _round_up(B, CHUNK)))
    grid = pl.cdiv(B, tb)
    b_pad = grid * tb

    # Host-side layout plumbing only:
    #   x^T : (in_dim, b_pad) feature-major, zero-padded rows sliced off below.
    #   W   : (out, in), b: (out, 1)  (nn.Linear-native storage).
    xT = jnp.pad(x, ((0, b_pad - B), (0, 0))).T
    w1t, b1c = w1.T, b1.T
    w2t, b2c = w2.T, b2.T
    w3t, b3c = w3.T, b3.T
    reduce_head = (num_outputs == 1)
    w4a = w4 if reduce_head else w4.T      # (hidden, 1) column, or (out, hidden)
    b4a = b4.T                             # (num_outputs, 1)

    def const(shape):  # weights/biases: constant block index -> stay VMEM-resident
        return pl.BlockSpec(shape, lambda i: (0, 0))

    out_fm = pl.pallas_call(
        _make_kernel(CHUNK, reduce_head),
        out_shape=jax.ShapeDtypeStruct((num_outputs, b_pad), jnp.float32),
        grid=(grid,),
        in_specs=[
            pl.BlockSpec((in_dim, tb), lambda i: (0, i)),   # x^T tiled over batch lanes
            const(w1t.shape), const(b1c.shape),
            const(w2t.shape), const(b2c.shape),
            const(w3t.shape), const(b3c.shape),
            const(w4a.shape), const(b4a.shape),
        ],
        out_specs=pl.BlockSpec((num_outputs, tb), lambda i: (0, i)),
        compiler_params=pltpu.CompilerParams(
            dimension_semantics=("parallel",),  # independent batch tiles (v7x 2 TCs)
        ),
    )(xT, w1t, b1c, w2t, b2c, w3t, b3c, w4a, b4a)

    return out_fm[:, :B].T                 # back to (B, num_outputs)


def init_params(key, input_size=3, hidden_size=10, num_hidden_layers=3, num_outputs=1):
    """Deterministic synthetic parameters matching the PyTorch module's layer shapes."""
    dims = [input_size] + [hidden_size] * num_hidden_layers + [num_outputs]
    params = []
    for i in range(len(dims) - 1):
        key, kw, kb = jax.random.split(key, 3)
        bound = 1.0 / jnp.sqrt(dims[i])
        W = jax.random.uniform(kw, (dims[i], dims[i + 1]),
                               minval=-bound, maxval=bound, dtype=jnp.float32)
        b = jax.random.uniform(kb, (1, dims[i + 1]),
                               minval=-bound, maxval=bound, dtype=jnp.float32)
        params.append((W, b))
    return tuple(params)


if __name__ == "__main__":
    key = jax.random.PRNGKey(0)
    key, kx = jax.random.split(key)

    batch = 1000          # non-multiple of the tile: exercises batch padding
    input_size = 3
    x = jax.random.normal(kx, (batch, input_size), dtype=jnp.float32)

    params = init_params(key, input_size=input_size, hidden_size=10,
                         num_hidden_layers=3, num_outputs=1)

    # block_batch=512 forces grid=2 so the pipelined / multi-step path is exercised too.
    logits = neural_network_forward(x, params, block_batch=512)
    jax.block_until_ready(logits)

    # Pure-JAX reference (same math, outside Pallas; HIGHEST precision so the reference
    # dot is as accurate as the kernel's exact-f32 VPU arithmetic).
    h = x
    for i, (W, b) in enumerate(params):
        h = jnp.dot(h, W, precision=jax.lax.Precision.HIGHEST) + b
        if i < len(params) - 1:
            h = jnp.maximum(h, 0.0)
    assert logits.shape == h.shape, "shape mismatch vs reference"
    assert jnp.allclose(logits, h, atol=1e-5, rtol=1e-5), "mismatch vs reference"

    print("KERNEL_OK")
</pallas_src>

<mosaic_0001>
module attributes {stable_mosaic.version = 11 : i64} {
  func.func @kernel(%arg0: i32, %arg1: memref<3x512xf32, #tpu.memory_space<vmem>>, %arg2: memref<10x3xf32, #tpu.memory_space<vmem>>, %arg3: memref<10x1xf32, #tpu.memory_space<vmem>>, %arg4: memref<10x10xf32, #tpu.memory_space<vmem>>, %arg5: memref<10x1xf32, #tpu.memory_space<vmem>>, %arg6: memref<10x10xf32, #tpu.memory_space<vmem>>, %arg7: memref<10x1xf32, #tpu.memory_space<vmem>>, %arg8: memref<10x1xf32, #tpu.memory_space<vmem>>, %arg9: memref<1x1xf32, #tpu.memory_space<vmem>>, %arg10: memref<1x512xf32, #tpu.memory_space<vmem>>) attributes {dimension_semantics = [#tpu.dimension_semantics<parallel>], iteration_bounds = array<i64: 2>, scalar_prefetch = 0 : i64, scratch_operands = 0 : i64, tpu.core_type = #tpu.core_type<tc>, window_params = [{transform_indices = @transform_0, window_bounds = array<i64: 3, 512>}, {pipeline_mode = #tpu.pipeline_mode<synchronous>, transform_indices = @transform_1, window_bounds = array<i64: 10, 3>}, {pipeline_mode = #tpu.pipeline_mode<synchronous>, transform_indices = @transform_2, window_bounds = array<i64: 10, 1>}, {pipeline_mode = #tpu.pipeline_mode<synchronous>, transform_indices = @transform_3, window_bounds = array<i64: 10, 10>}, {pipeline_mode = #tpu.pipeline_mode<synchronous>, transform_indices = @transform_4, window_bounds = array<i64: 10, 1>}, {pipeline_mode = #tpu.pipeline_mode<synchronous>, transform_indices = @transform_5, window_bounds = array<i64: 10, 10>}, {pipeline_mode = #tpu.pipeline_mode<synchronous>, transform_indices = @transform_6, window_bounds = array<i64: 10, 1>}, {pipeline_mode = #tpu.pipeline_mode<synchronous>, transform_indices = @transform_7, window_bounds = array<i64: 10, 1>}, {pipeline_mode = #tpu.pipeline_mode<synchronous>, transform_indices = @transform_8, window_bounds = array<i64: 1, 1>}, {transform_indices = @transform_9, window_bounds = array<i64: 1, 512>}]} {
    %c0 = arith.constant 0 : index
    %c0_0 = arith.constant 0 : index
    %0 = vector.load %arg3[%c0, %c0_0] : memref<10x1xf32, #tpu.memory_space<vmem>>, vector<10x1xf32>
    %1 = vector.shape_cast %0 : vector<10x1xf32> to vector<10x1xf32>
    %2 = vector.broadcast %1 : vector<10x1xf32> to vector<10x512xf32>
    %c0_1 = arith.constant 0 : index
    %c0_2 = arith.constant 0 : index
    %3 = vector.load %arg5[%c0_1, %c0_2] : memref<10x1xf32, #tpu.memory_space<vmem>>, vector<10x1xf32>
    %4 = vector.shape_cast %3 : vector<10x1xf32> to vector<10x1xf32>
    %5 = vector.broadcast %4 : vector<10x1xf32> to vector<10x512xf32>
    %c0_3 = arith.constant 0 : index
    %c0_4 = arith.constant 0 : index
    %6 = vector.load %arg7[%c0_3, %c0_4] : memref<10x1xf32, #tpu.memory_space<vmem>>, vector<10x1xf32>
    %7 = vector.shape_cast %6 : vector<10x1xf32> to vector<10x1xf32>
    %8 = vector.broadcast %7 : vector<10x1xf32> to vector<10x512xf32>
    %c0_5 = arith.constant 0 : index
    %c0_6 = arith.constant 0 : index
    %9 = vector.load %arg8[%c0_5, %c0_6] : memref<10x1xf32, #tpu.memory_space<vmem>>, vector<10x1xf32>
    %c0_7 = arith.constant 0 : index
    %c0_8 = arith.constant 0 : index
    %10 = vector.load %arg9[%c0_7, %c0_8] : memref<1x1xf32, #tpu.memory_space<vmem>>, vector<1x1xf32>
    %c0_9 = arith.constant 0 : index
    %c0_10 = arith.constant 0 : index
    %11 = vector.load %arg1[%c0_9, %c0_10] : memref<3x512xf32, #tpu.memory_space<vmem>>, vector<3x512xf32>
    %c0_11 = arith.constant 0 : index
    %c0_12 = arith.constant 0 : index
    %12 = vector.load %arg2[%c0_11, %c0_12] : memref<10x3xf32, #tpu.memory_space<vmem>>, vector<10x1xf32>
    %13 = vector.extract_strided_slice %11 {offsets = [0, 0], sizes = [1, 512], strides = [1, 1]} : vector<3x512xf32> to vector<1x512xf32>
    %14 = vector.broadcast %12 : vector<10x1xf32> to vector<10x512xf32>
    %15 = vector.broadcast %13 : vector<1x512xf32> to vector<10x512xf32>
    %16 = arith.mulf %14, %15 : vector<10x512xf32>
    %17 = arith.addf %2, %16 : vector<10x512xf32>
    %c0_13 = arith.constant 0 : index
    %c1 = arith.constant 1 : index
    %18 = vector.load %arg2[%c0_13, %c1] : memref<10x3xf32, #tpu.memory_space<vmem>>, vector<10x1xf32>
    %19 = vector.extract_strided_slice %11 {offsets = [1, 0], sizes = [1, 512], strides = [1, 1]} : vector<3x512xf32> to vector<1x512xf32>
    %20 = vector.broadcast %18 : vector<10x1xf32> to vector<10x512xf32>
    %21 = vector.broadcast %19 : vector<1x512xf32> to vector<10x512xf32>
    %22 = arith.mulf %20, %21 : vector<10x512xf32>
    %23 = arith.addf %17, %22 : vector<10x512xf32>
    %c0_14 = arith.constant 0 : index
    %c2 = arith.constant 2 : index
    %24 = vector.load %arg2[%c0_14, %c2] : memref<10x3xf32, #tpu.memory_space<vmem>>, vector<10x1xf32>
    %25 = vector.extract_strided_slice %11 {offsets = [2, 0], sizes = [1, 512], strides = [1, 1]} : vector<3x512xf32> to vector<1x512xf32>
    %26 = vector.broadcast %24 : vector<10x1xf32> to vector<10x512xf32>
    %27 = vector.broadcast %25 : vector<1x512xf32> to vector<10x512xf32>
    %28 = arith.mulf %26, %27 : vector<10x512xf32>
    %29 = arith.addf %23, %28 : vector<10x512xf32>
    %cst = arith.constant 0.000000e+00 : f32
    %30 = vector.broadcast %cst : f32 to vector<10x512xf32>
    %31 = arith.maximumf %29, %30 : vector<10x512xf32>
    %c0_15 = arith.constant 0 : index
    %c0_16 = arith.constant 0 : index
    %32 = vector.load %arg4[%c0_15, %c0_16] : memref<10x10xf32, #tpu.memory_space<vmem>>, vector<10x1xf32>
    %33 = vector.extract_strided_slice %31 {offsets = [0, 0], sizes = [1, 512], strides = [1, 1]} : vector<10x512xf32> to vector<1x512xf32>
    %34 = vector.broadcast %32 : vector<10x1xf32> to vector<10x512xf32>
    %35 = vector.broadcast %33 : vector<1x512xf32> to vector<10x512xf32>
    %36 = arith.mulf %34, %35 : vector<10x512xf32>
    %37 = arith.addf %5, %36 : vector<10x512xf32>
    %c0_17 = arith.constant 0 : index
    %c1_18 = arith.constant 1 : index
    %38 = vector.load %arg4[%c0_17, %c1_18] : memref<10x10xf32, #tpu.memory_space<vmem>>, vector<10x1xf32>
    %39 = vector.extract_strided_slice %31 {offsets = [1, 0], sizes = [1, 512], strides = [1, 1]} : vector<10x512xf32> to vector<1x512xf32>
    %40 = vector.broadcast %38 : vector<10x1xf32> to vector<10x512xf32>
    %41 = vector.broadcast %39 : vector<1x512xf32> to vector<10x512xf32>
    %42 = arith.mulf %40, %41 : vector<10x512xf32>
    %43 = arith.addf %37, %42 : vector<10x512xf32>
    %c0_19 = arith.constant 0 : index
    %c2_20 = arith.constant 2 : index
    %44 = vector.load %arg4[%c0_19, %c2_20] : memref<10x10xf32, #tpu.memory_space<vmem>>, vector<10x1xf32>
    %45 = vector.extract_strided_slice %31 {offsets = [2, 0], sizes = [1, 512], strides = [1, 1]} : vector<10x512xf32> to vector<1x512xf32>
    %46 = vector.broadcast %44 : vector<10x1xf32> to vector<10x512xf32>
    %47 = vector.broadcast %45 : vector<1x512xf32> to vector<10x512xf32>
    %48 = arith.mulf %46, %47 : vector<10x512xf32>
    %49 = arith.addf %43, %48 : vector<10x512xf32>
    %c0_21 = arith.constant 0 : index
    %c3 = arith.constant 3 : index
    %50 = vector.load %arg4[%c0_21, %c3] : memref<10x10xf32, #tpu.memory_space<vmem>>, vector<10x1xf32>
    %51 = vector.extract_strided_slice %31 {offsets = [3, 0], sizes = [1, 512], strides = [1, 1]} : vector<10x512xf32> to vector<1x512xf32>
    %52 = vector.broadcast %50 : vector<10x1xf32> to vector<10x512xf32>
    %53 = vector.broadcast %51 : vector<1x512xf32> to vector<10x512xf32>
    %54 = arith.mulf %52, %53 : vector<10x512xf32>
    %55 = arith.addf %49, %54 : vector<10x512xf32>
    %c0_22 = arith.constant 0 : index
    %c4 = arith.constant 4 : index
    %56 = vector.load %arg4[%c0_22, %c4] : memref<10x10xf32, #tpu.memory_space<vmem>>, vector<10x1xf32>
    %57 = vector.extract_strided_slice %31 {offsets = [4, 0], sizes = [1, 512], strides = [1, 1]} : vector<10x512xf32> to vector<1x512xf32>
    %58 = vector.broadcast %56 : vector<10x1xf32> to vector<10x512xf32>
    %59 = vector.broadcast %57 : vector<1x512xf32> to vector<10x512xf32>
    %60 = arith.mulf %58, %59 : vector<10x512xf32>
    %61 = arith.addf %55, %60 : vector<10x512xf32>
    %c0_23 = arith.constant 0 : index
    %c5 = arith.constant 5 : index
    %62 = vector.load %arg4[%c0_23, %c5] : memref<10x10xf32, #tpu.memory_space<vmem>>, vector<10x1xf32>
    %63 = vector.extract_strided_slice %31 {offsets = [5, 0], sizes = [1, 512], strides = [1, 1]} : vector<10x512xf32> to vector<1x512xf32>
    %64 = vector.broadcast %62 : vector<10x1xf32> to vector<10x512xf32>
    %65 = vector.broadcast %63 : vector<1x512xf32> to vector<10x512xf32>
    %66 = arith.mulf %64, %65 : vector<10x512xf32>
    %67 = arith.addf %61, %66 : vector<10x512xf32>
    %c0_24 = arith.constant 0 : index
    %c6 = arith.constant 6 : index
    %68 = vector.load %arg4[%c0_24, %c6] : memref<10x10xf32, #tpu.memory_space<vmem>>, vector<10x1xf32>
    %69 = vector.extract_strided_slice %31 {offsets = [6, 0], sizes = [1, 512], strides = [1, 1]} : vector<10x512xf32> to vector<1x512xf32>
    %70 = vector.broadcast %68 : vector<10x1xf32> to vector<10x512xf32>
    %71 = vector.broadcast %69 : vector<1x512xf32> to vector<10x512xf32>
    %72 = arith.mulf %70, %71 : vector<10x512xf32>
    %73 = arith.addf %67, %72 : vector<10x512xf32>
    %c0_25 = arith.constant 0 : index
    %c7 = arith.constant 7 : index
    %74 = vector.load %arg4[%c0_25, %c7] : memref<10x10xf32, #tpu.memory_space<vmem>>, vector<10x1xf32>
    %75 = vector.extract_strided_slice %31 {offsets = [7, 0], sizes = [1, 512], strides = [1, 1]} : vector<10x512xf32> to vector<1x512xf32>
    %76 = vector.broadcast %74 : vector<10x1xf32> to vector<10x512xf32>
    %77 = vector.broadcast %75 : vector<1x512xf32> to vector<10x512xf32>
    %78 = arith.mulf %76, %77 : vector<10x512xf32>
    %79 = arith.addf %73, %78 : vector<10x512xf32>
    %c0_26 = arith.constant 0 : index
    %c8 = arith.constant 8 : index
    %80 = vector.load %arg4[%c0_26, %c8] : memref<10x10xf32, #tpu.memory_space<vmem>>, vector<10x1xf32>
    %81 = vector.extract_strided_slice %31 {offsets = [8, 0], sizes = [1, 512], strides = [1, 1]} : vector<10x512xf32> to vector<1x512xf32>
    %82 = vector.broadcast %80 : vector<10x1xf32> to vector<10x512xf32>
    %83 = vector.broadcast %81 : vector<1x512xf32> to vector<10x512xf32>
    %84 = arith.mulf %82, %83 : vector<10x512xf32>
    %85 = arith.addf %79, %84 : vector<10x512xf32>
    %c0_27 = arith.constant 0 : index
    %c9 = arith.constant 9 : index
    %86 = vector.load %arg4[%c0_27, %c9] : memref<10x10xf32, #tpu.memory_space<vmem>>, vector<10x1xf32>
    %87 = vector.extract_strided_slice %31 {offsets = [9, 0], sizes = [1, 512], strides = [1, 1]} : vector<10x512xf32> to vector<1x512xf32>
    %88 = vector.broadcast %86 : vector<10x1xf32> to vector<10x512xf32>
    %89 = vector.broadcast %87 : vector<1x512xf32> to vector<10x512xf32>
    %90 = arith.mulf %88, %89 : vector<10x512xf32>
    %91 = arith.addf %85, %90 : vector<10x512xf32>
    %cst_28 = arith.constant 0.000000e+00 : f32
    %92 = vector.broadcast %cst_28 : f32 to vector<10x512xf32>
    %93 = arith.maximumf %91, %92 : vector<10x512xf32>
    %c0_29 = arith.constant 0 : index
    %c0_30 = arith.constant 0 : index
    %94 = vector.load %arg6[%c0_29, %c0_30] : memref<10x10xf32, #tpu.memory_space<vmem>>, vector<10x1xf32>
    %95 = vector.extract_strided_slice %93 {offsets = [0, 0], sizes = [1, 512], strides = [1, 1]} : vector<10x512xf32> to vector<1x512xf32>
    %96 = vector.broadcast %94 : vector<10x1xf32> to vector<10x512xf32>
    %97 = vector.broadcast %95 : vector<1x512xf32> to vector<10x512xf32>
    %98 = arith.mulf %96, %97 : vector<10x512xf32>
    %99 = arith.addf %8, %98 : vector<10x512xf32>
    %c0_31 = arith.constant 0 : index
    %c1_32 = arith.constant 1 : index
    %100 = vector.load %arg6[%c0_31, %c1_32] : memref<10x10xf32, #tpu.memory_space<vmem>>, vector<10x1xf32>
    %101 = vector.extract_strided_slice %93 {offsets = [1, 0], sizes = [1, 512], strides = [1, 1]} : vector<10x512xf32> to vector<1x512xf32>
    %102 = vector.broadcast %100 : vector<10x1xf32> to vector<10x512xf32>
    %103 = vector.broadcast %101 : vector<1x512xf32> to vector<10x512xf32>
    %104 = arith.mulf %102, %103 : vector<10x512xf32>
    %105 = arith.addf %99, %104 : vector<10x512xf32>
    %c0_33 = arith.constant 0 : index
    %c2_34 = arith.constant 2 : index
    %106 = vector.load %arg6[%c0_33, %c2_34] : memref<10x10xf32, #tpu.memory_space<vmem>>, vector<10x1xf32>
    %107 = vector.extract_strided_slice %93 {offsets = [2, 0], sizes = [1, 512], strides = [1, 1]} : vector<10x512xf32> to vector<1x512xf32>
    %108 = vector.broadcast %106 : vector<10x1xf32> to vector<10x512xf32>
    %109 = vector.broadcast %107 : vector<1x512xf32> to vector<10x512xf32>
    %110 = arith.mulf %108, %109 : vector<10x512xf32>
    %111 = arith.addf %105, %110 : vector<10x512xf32>
    %c0_35 = arith.constant 0 : index
    %c3_36 = arith.constant 3 : index
    %112 = vector.load %arg6[%c0_35, %c3_36] : memref<10x10xf32, #tpu.memory_space<vmem>>, vector<10x1xf32>
    %113 = vector.extract_strided_slice %93 {offsets = [3, 0], sizes = [1, 512], strides = [1, 1]} : vector<10x512xf32> to vector<1x512xf32>
    %114 = vector.broadcast %112 : vector<10x1xf32> to vector<10x512xf32>
    %115 = vector.broadcast %113 : vector<1x512xf32> to vector<10x512xf32>
    %116 = arith.mulf %114, %115 : vector<10x512xf32>
    %117 = arith.addf %111, %116 : vector<10x512xf32>
    %c0_37 = arith.constant 0 : index
    %c4_38 = arith.constant 4 : index
    %118 = vector.load %arg6[%c0_37, %c4_38] : memref<10x10xf32, #tpu.memory_space<vmem>>, vector<10x1xf32>
    %119 = vector.extract_strided_slice %93 {offsets = [4, 0], sizes = [1, 512], strides = [1, 1]} : vector<10x512xf32> to vector<1x512xf32>
    %120 = vector.broadcast %118 : vector<10x1xf32> to vector<10x512xf32>
    %121 = vector.broadcast %119 : vector<1x512xf32> to vector<10x512xf32>
    %122 = arith.mulf %120, %121 : vector<10x512xf32>
    %123 = arith.addf %117, %122 : vector<10x512xf32>
    %c0_39 = arith.constant 0 : index
    %c5_40 = arith.constant 5 : index
    %124 = vector.load %arg6[%c0_39, %c5_40] : memref<10x10xf32, #tpu.memory_space<vmem>>, vector<10x1xf32>
    %125 = vector.extract_strided_slice %93 {offsets = [5, 0], sizes = [1, 512], strides = [1, 1]} : vector<10x512xf32> to vector<1x512xf32>
    %126 = vector.broadcast %124 : vector<10x1xf32> to vector<10x512xf32>
    %127 = vector.broadcast %125 : vector<1x512xf32> to vector<10x512xf32>
    %128 = arith.mulf %126, %127 : vector<10x512xf32>
    %129 = arith.addf %123, %128 : vector<10x512xf32>
    %c0_41 = arith.constant 0 : index
    %c6_42 = arith.constant 6 : index
    %130 = vector.load %arg6[%c0_41, %c6_42] : memref<10x10xf32, #tpu.memory_space<vmem>>, vector<10x1xf32>
    %131 = vector.extract_strided_slice %93 {offsets = [6, 0], sizes = [1, 512], strides = [1, 1]} : vector<10x512xf32> to vector<1x512xf32>
    %132 = vector.broadcast %130 : vector<10x1xf32> to vector<10x512xf32>
    %133 = vector.broadcast %131 : vector<1x512xf32> to vector<10x512xf32>
    %134 = arith.mulf %132, %133 : vector<10x512xf32>
    %135 = arith.addf %129, %134 : vector<10x512xf32>
    %c0_43 = arith.constant 0 : index
    %c7_44 = arith.constant 7 : index
    %136 = vector.load %arg6[%c0_43, %c7_44] : memref<10x10xf32, #tpu.memory_space<vmem>>, vector<10x1xf32>
    %137 = vector.extract_strided_slice %93 {offsets = [7, 0], sizes = [1, 512], strides = [1, 1]} : vector<10x512xf32> to vector<1x512xf32>
    %138 = vector.broadcast %136 : vector<10x1xf32> to vector<10x512xf32>
    %139 = vector.broadcast %137 : vector<1x512xf32> to vector<10x512xf32>
    %140 = arith.mulf %138, %139 : vector<10x512xf32>
    %141 = arith.addf %135, %140 : vector<10x512xf32>
    %c0_45 = arith.constant 0 : index
    %c8_46 = arith.constant 8 : index
    %142 = vector.load %arg6[%c0_45, %c8_46] : memref<10x10xf32, #tpu.memory_space<vmem>>, vector<10x1xf32>
    %143 = vector.extract_strided_slice %93 {offsets = [8, 0], sizes = [1, 512], strides = [1, 1]} : vector<10x512xf32> to vector<1x512xf32>
    %144 = vector.broadcast %142 : vector<10x1xf32> to vector<10x512xf32>
    %145 = vector.broadcast %143 : vector<1x512xf32> to vector<10x512xf32>
    %146 = arith.mulf %144, %145 : vector<10x512xf32>
    %147 = arith.addf %141, %146 : vector<10x512xf32>
    %c0_47 = arith.constant 0 : index
    %c9_48 = arith.constant 9 : index
    %148 = vector.load %arg6[%c0_47, %c9_48] : memref<10x10xf32, #tpu.memory_space<vmem>>, vector<10x1xf32>
    %149 = vector.extract_strided_slice %93 {offsets = [9, 0], sizes = [1, 512], strides = [1, 1]} : vector<10x512xf32> to vector<1x512xf32>
    %150 = vector.broadcast %148 : vector<10x1xf32> to vector<10x512xf32>
    %151 = vector.broadcast %149 : vector<1x512xf32> to vector<10x512xf32>
    %152 = arith.mulf %150, %151 : vector<10x512xf32>
    %153 = arith.addf %147, %152 : vector<10x512xf32>
    %cst_49 = arith.constant 0.000000e+00 : f32
    %154 = vector.broadcast %cst_49 : f32 to vector<10x512xf32>
    %155 = arith.maximumf %153, %154 : vector<10x512xf32>
    %156 = vector.broadcast %9 : vector<10x1xf32> to vector<10x512xf32>
    %157 = arith.mulf %155, %156 : vector<10x512xf32>
    %cst_50 = arith.constant dense<0.000000e+00> : vector<512xf32>
    %158 = vector.multi_reduction <add>, %157, %cst_50 [0] : vector<10x512xf32> to vector<512xf32>
    %159 = vector.shape_cast %158 : vector<512xf32> to vector<1x512xf32>
    %160 = vector.broadcast %10 : vector<1x1xf32> to vector<1x512xf32>
    %161 = arith.addf %159, %160 : vector<1x512xf32>
    %c0_51 = arith.constant 0 : index
    %c0_52 = arith.constant 0 : index
    %162 = vector.load %arg10[%c0_51, %c0_52] : memref<1x512xf32, #tpu.memory_space<vmem>>, vector<1x512xf32>
    tpu.vector_store %arg10[%c0_51, %c0_52], %161 {strides = array<i32>} : memref<1x512xf32, #tpu.memory_space<vmem>>, vector<1x512xf32>,
    return
  }
  func.func @transform_0(%arg0: i32) -> (i32, i32) {
    %c0_i32 = arith.constant 0 : i32
    %c0_i32_0 = arith.constant 0 : i32
    return %c0_i32, %arg0 : i32, i32
  }
  func.func @transform_1(%arg0: i32) -> (i32, i32) {
    %c0_i32 = arith.constant 0 : i32
    %c0_i32_0 = arith.constant 0 : i32
    %c0_i32_1 = arith.constant 0 : i32
    return %c0_i32, %c0_i32_0 : i32, i32
  }
  func.func @transform_2(%arg0: i32) -> (i32, i32) {
    %c0_i32 = arith.constant 0 : i32
    %c0_i32_0 = arith.constant 0 : i32
    %c0_i32_1 = arith.constant 0 : i32
    return %c0_i32, %c0_i32_0 : i32, i32
  }
  func.func @transform_3(%arg0: i32) -> (i32, i32) {
    %c0_i32 = arith.constant 0 : i32
    %c0_i32_0 = arith.constant 0 : i32
    %c0_i32_1 = arith.constant 0 : i32
    return %c0_i32, %c0_i32_0 : i32, i32
  }
  func.func @transform_4(%arg0: i32) -> (i32, i32) {
    %c0_i32 = arith.constant 0 : i32
    %c0_i32_0 = arith.constant 0 : i32
    %c0_i32_1 = arith.constant 0 : i32
    return %c0_i32, %c0_i32_0 : i32, i32
  }
  func.func @transform_5(%arg0: i32) -> (i32, i32) {
    %c0_i32 = arith.constant 0 : i32
    %c0_i32_0 = arith.constant 0 : i32
    %c0_i32_1 = arith.constant 0 : i32
    return %c0_i32, %c0_i32_0 : i32, i32
  }
  func.func @transform_6(%arg0: i32) -> (i32, i32) {
    %c0_i32 = arith.constant 0 : i32
    %c0_i32_0 = arith.constant 0 : i32
    %c0_i32_1 = arith.constant 0 : i32
    return %c0_i32, %c0_i32_0 : i32, i32
  }
  func.func @transform_7(%arg0: i32) -> (i32, i32) {
    %c0_i32 = arith.constant 0 : i32
    %c0_i32_0 = arith.constant 0 : i32
    %c0_i32_1 = arith.constant 0 : i32
    return %c0_i32, %c0_i32_0 : i32, i32
  }
  func.func @transform_8(%arg0: i32) -> (i32, i32) {
    %c0_i32 = arith.constant 0 : i32
    %c0_i32_0 = arith.constant 0 : i32
    %c0_i32_1 = arith.constant 0 : i32
    return %c0_i32, %c0_i32_0 : i32, i32
  }
  func.func @transform_9(%arg0: i32) -> (i32, i32) {
    %c0_i32 = arith.constant 0 : i32
    %c0_i32_0 = arith.constant 0 : i32
    return %c0_i32, %arg0 : i32, i32
  }
}

</mosaic_0001>

<llo_original>
// kernel: tpu_custom_call.1
$region0: #{tpu_custom_call.1}
  #allocation0 [shape = 'u32[]', space=smem, size = 0x4, offset = 0x4, fixed_abs, tag = 'smem constant byte address 0x4 - core index']
  #allocation1 [shape = 'u32[144,128]{1,0:T(1,128)}', space=vmem, size = 0x12000, scoped, tag = 'internal scratch']
  #allocation2 [shape = 'f32[1,1]{1,0:T(1,128)S(1)}', space=vmem, size = 0x200, scoped, tag = 'scoped memory for tpu_custom_call.1']
  %s0 = inlined_call_operand.vmem [shape: f32[3,1024], index: 0, kind: input, shape index: {}]
  %s1 = inlined_call_operand.vmem [shape: f32[10,3], index: 1, kind: input, shape index: {}]
  %s2 = inlined_call_operand.vmem [shape: f32[10,1], index: 2, kind: input, shape index: {}]
  %s3 = inlined_call_operand.vmem [shape: f32[10,10], index: 3, kind: input, shape index: {}]
  %s4 = inlined_call_operand.vmem [shape: f32[10,1], index: 4, kind: input, shape index: {}]
  %s5 = inlined_call_operand.vmem [shape: f32[10,10], index: 5, kind: input, shape index: {}]
  %s6 = inlined_call_operand.vmem [shape: f32[10,1], index: 6, kind: input, shape index: {}]
  %s7 = inlined_call_operand.vmem [shape: f32[10,1], index: 7, kind: input, shape index: {}]
  %s8 = inlined_call_operand.<no memory space> [shape: f32[1,1], index: 8, kind: input, shape index: {}]
  %s9 = inlined_call_operand.hbm [shape: f32[1,1024], index: 9, kind: output, shape index: {}]
  %s10 = sld [smem:[#allocation0]]
  $region69: #{tpu_custom_call.1} parent=0
    _
  %s12 = ssub.s32 1, %s10
  %s13 = scalar_select 0, %s12, %s10
  %v14 = vstv %s8
  %15 = vst [vmem:[#allocation2] sm:$0x1] %v14
  $region1: #{tpu_custom_call.1} parent=0
    #allocation3 [shape = 'u8[4096]{0}', space=vmem, size = 0x1000, scoped, tag = 'output window, operand 0']
    #allocation4 [shape = 's32[2]{0}', space=sflag, size = 0x8, scoped, tag = 'scoped memory for tpu_custom_call.1']
    %16 = vsyncpa [#allocation4], 0
    %s17 = scalar_lea.sflag [#allocation4], 1
    %18 = vsyncpa %s17, 0
    loop: start=0, step=1, limit=4
    $region2: #{tpu_custom_call.1} parent=1 // loop_pre_header
      _
    $region3: #{tpu_custom_call.1} parent=1 // loop_header
      %s20 = sphi 0, %s24
      %p21 = scmp.ge.s32.totalorder %s20, 4
      %s30 = sphi 0, %s32
      %s33 = sphi 0, %s30
      %s34 = sphi 0, %s33
      %s50 = sphi 0, %s34
      %s54 = sphi 0, %s54
      %s56 = sphi 0, %s54
      %s57 = sphi 0, %s56
      %s71 = sphi 0, %s57
      %s75 = sphi 0, %s75
      %s77 = sphi 0, %s75
      %s78 = sphi 0, %s77
      %s92 = sphi 0, %s78
      %s96 = sphi 0, %s96
      %s98 = sphi 0, %s96
      %s99 = sphi 0, %s98
      %s113 = sphi 0, %s99
      %s117 = sphi 0, %s117
      %s119 = sphi 0, %s117
      %s120 = sphi 0, %s119
      %s134 = sphi 0, %s120
      %s138 = sphi 0, %s138
      %s140 = sphi 0, %s138
      %s141 = sphi 0, %s140
      %s155 = sphi 0, %s141
      %s159 = sphi 0, %s159
      %s161 = sphi 0, %s159
      %s162 = sphi 0, %s161
      %s176 = sphi 0, %s162
      %s180 = sphi 0, %s180
      %s182 = sphi 0, %s180
      %s183 = sphi 0, %s182
      %s197 = sphi 0, %s183
      %s201 = sphi 0, %s201
      %s203 = sphi 0, %s201
      %s204 = sphi 0, %s203
      %s218 = sphi 0, %s204
      %s224 = sphi 0, %s226
      %s227 = sphi 0, %s224
      %s228 = sphi 0, %s227
      %s244 = sphi 0, %s228
    $region4: #{tpu_custom_call.1} parent=1 // loop_header_branch
      %23 = sbr.rel (%p21) target = $region8
    $region5: #{tpu_custom_call.1} parent=1 // loop_body
      %s25 = ssub.s32 %s20, 1
      %s26 = ssub.s32 %s20, 2
      %s27 = sadd.s32 %s20, 1
      %s28 = ssub.s32 %s20, %s27
      %p29 = scmp.eq.s32.totalorder %s28, 0
      %s31 = sadd.s32 %s30, 1
      %s32 = scalar_select %p29, %s30, %s31
      %p35 = pneg %p29
      %p36 = scmp.eq.s32.totalorder %s20, 1
      %p37 = por %p35, %p36
      %p38 = scmp.ne.s32.totalorder %s30, %s33
      %p39 = scmp.eq.s32.totalorder %s20, 0
      %p40 = por %p38, %p39
      %p41 = scmp.ne.s32.totalorder %s30, %s33
      %p42 = scmp.eq.s32.totalorder %s25, 1
      %p43 = por %p41, %p42
      %p44 = scmp.ne.s32.totalorder %s33, %s34
      %p45 = scmp.eq.s32.totalorder %s25, 0
      %p46 = por %p44, %p45
      %p47 = scmp.ne.s32.totalorder %s33, %s34
      %p48 = scmp.eq.s32.totalorder %s26, 1
      %p49 = por %p47, %p48
      %p51 = scmp.ne.s32.totalorder %s34, %s50
      %p52 = scmp.eq.s32.totalorder %s26, 0
      %p53 = por %p51, %p52
      %s55 = sadd.s32 %s54, 1
      %p58 = scmp.eq.s32.totalorder %s20, 1
      %p59 = scmp.ne.s32.totalorder %s54, %s56
      %p60 = scmp.eq.s32.totalorder %s20, 0
      %p61 = por %p59, %p60
      %p62 = scmp.ne.s32.totalorder %s54, %s56
      %p63 = scmp.eq.s32.totalorder %s25, 1
      %p64 = por %p62, %p63
      %p65 = scmp.ne.s32.totalorder %s56, %s57
      %p66 = scmp.eq.s32.totalorder %s25, 0
      %p67 = por %p65, %p66
      %p68 = scmp.ne.s32.totalorder %s56, %s57
      %p69 = scmp.eq.s32.totalorder %s26, 1
      %p70 = por %p68, %p69
      %p72 = scmp.ne.s32.totalorder %s57, %s71
      %p73 = scmp.eq.s32.totalorder %s26, 0
      %p74 = por %p72, %p73
      %s76 = sadd.s32 %s75, 1
      %p79 = scmp.eq.s32.totalorder %s20, 1
      %p80 = scmp.ne.s32.totalorder %s75, %s77
      %p81 = scmp.eq.s32.totalorder %s20, 0
      %p82 = por %p80, %p81
      %p83 = scmp.ne.s32.totalorder %s75, %s77
      %p84 = scmp.eq.s32.totalorder %s25, 1
      %p85 = por %p83, %p84
      %p86 = scmp.ne.s32.totalorder %s77, %s78
      %p87 = scmp.eq.s32.totalorder %s25, 0
      %p88 = por %p86, %p87
      %p89 = scmp.ne.s32.totalorder %s77, %s78
      %p90 = scmp.eq.s32.totalorder %s26, 1
      %p91 = por %p89, %p90
      %p93 = scmp.ne.s32.totalorder %s78, %s92
      %p94 = scmp.eq.s32.totalorder %s26, 0
      %p95 = por %p93, %p94
      %s97 = sadd.s32 %s96, 1
      %p100 = scmp.eq.s32.totalorder %s20, 1
      %p101 = scmp.ne.s32.totalorder %s96, %s98
      %p102 = scmp.eq.s32.totalorder %s20, 0
      %p103 = por %p101, %p102
      %p104 = scmp.ne.s32.totalorder %s96, %s98
      %p105 = scmp.eq.s32.totalorder %s25, 1
      %p106 = por %p104, %p105
      %p107 = scmp.ne.s32.totalorder %s98, %s99
      %p108 = scmp.eq.s32.totalorder %s25, 0
      %p109 = por %p107, %p108
      %p110 = scmp.ne.s32.totalorder %s98, %s99
      %p111 = scmp.eq.s32.totalorder %s26, 1
      %p112 = por %p110, %p111
      %p114 = scmp.ne.s32.totalorder %s99, %s113
      %p115 = scmp.eq.s32.totalorder %s26, 0
      %p116 = por %p114, %p115
      %s118 = sadd.s32 %s117, 1
      %p121 = scmp.eq.s32.totalorder %s20, 1
      %p122 = scmp.ne.s32.totalorder %s117, %s119
      %p123 = scmp.eq.s32.totalorder %s20, 0
      %p124 = por %p122, %p123
      %p125 = scmp.ne.s32.totalorder %s117, %s119
      %p126 = scmp.eq.s32.totalorder %s25, 1
      %p127 = por %p125, %p126
      %p128 = scmp.ne.s32.totalorder %s119, %s120
      %p129 = scmp.eq.s32.totalorder %s25, 0
      %p130 = por %p128, %p129
      %p131 = scmp.ne.s32.totalorder %s119, %s120
      %p132 = scmp.eq.s32.totalorder %s26, 1
      %p133 = por %p131, %p132
      %p135 = scmp.ne.s32.totalorder %s120, %s134
      %p136 = scmp.eq.s32.totalorder %s26, 0
      %p137 = por %p135, %p136
      %s139 = sadd.s32 %s138, 1
      %p142 = scmp.eq.s32.totalorder %s20, 1
      %p143 = scmp.ne.s32.totalorder %s138, %s140
      %p144 = scmp.eq.s32.totalorder %s20, 0
      %p145 = por %p143, %p144
      %p146 = scmp.ne.s32.totalorder %s138, %s140
      %p147 = scmp.eq.s32.totalorder %s25, 1
      %p148 = por %p146, %p147
      %p149 = scmp.ne.s32.totalorder %s140, %s141
      %p150 = scmp.eq.s32.totalorder %s25, 0
      %p151 = por %p149, %p150
      %p152 = scmp.ne.s32.totalorder %s140, %s141
      %p153 = scmp.eq.s32.totalorder %s26, 1
      %p154 = por %p152, %p153
      %p156 = scmp.ne.s32.totalorder %s141, %s155
      %p157 = scmp.eq.s32.totalorder %s26, 0
      %p158 = por %p156, %p157
      %s160 = sadd.s32 %s159, 1
      %p163 = scmp.eq.s32.totalorder %s20, 1
      %p164 = scmp.ne.s32.totalorder %s159, %s161
      %p165 = scmp.eq.s32.totalorder %s20, 0
      %p166 = por %p164, %p165
      %p167 = scmp.ne.s32.totalorder %s159, %s161
      %p168 = scmp.eq.s32.totalorder %s25, 1
      %p169 = por %p167, %p168
      %p170 = scmp.ne.s32.totalorder %s161, %s162
      %p171 = scmp.eq.s32.totalorder %s25, 0
      %p172 = por %p170, %p171
      %p173 = scmp.ne.s32.totalorder %s161, %s162
      %p174 = scmp.eq.s32.totalorder %s26, 1
      %p175 = por %p173, %p174
      %p177 = scmp.ne.s32.totalorder %s162, %s176
      %p178 = scmp.eq.s32.totalorder %s26, 0
      %p179 = por %p177, %p178
      %s181 = sadd.s32 %s180, 1
      %p184 = scmp.eq.s32.totalorder %s20, 1
      %p185 = scmp.ne.s32.totalorder %s180, %s182
      %p186 = scmp.eq.s32.totalorder %s20, 0
      %p187 = por %p185, %p186
      %p188 = scmp.ne.s32.totalorder %s180, %s182
      %p189 = scmp.eq.s32.totalorder %s25, 1
      %p190 = por %p188, %p189
      %p191 = scmp.ne.s32.totalorder %s182, %s183
      %p192 = scmp.eq.s32.totalorder %s25, 0
      %p193 = por %p191, %p192
      %p194 = scmp.ne.s32.totalorder %s182, %s183
      %p195 = scmp.eq.s32.totalorder %s26, 1
      %p196 = por %p194, %p195
      %p198 = scmp.ne.s32.totalorder %s183, %s197
      %p199 = scmp.eq.s32.totalorder %s26, 0
      %p200 = por %p198, %p199
      %s202 = sadd.s32 %s201, 1
      %p205 = scmp.eq.s32.totalorder %s20, 1
      %p206 = scmp.ne.s32.totalorder %s201, %s203
      %p207 = scmp.eq.s32.totalorder %s20, 0
      %p208 = por %p206, %p207
      %p209 = scmp.ne.s32.totalorder %s201, %s203
      %p210 = scmp.eq.s32.totalorder %s25, 1
      %p211 = por %p209, %p210
      %p212 = scmp.ne.s32.totalorder %s203, %s204
      %p213 = scmp.eq.s32.totalorder %s25, 0
      %p214 = por %p212, %p213
      %p215 = scmp.ne.s32.totalorder %s203, %s204
      %p216 = scmp.eq.s32.totalorder %s26, 1
      %p217 = por %p215, %p216
      %p219 = scmp.ne.s32.totalorder %s204, %s218
      %p220 = scmp.eq.s32.totalorder %s26, 0
      %p221 = por %p219, %p220
      %s222 = ssub.s32 %s20, %s27
      %p223 = scmp.eq.s32.totalorder %s222, 0
      %s225 = sadd.s32 %s224, 1
      %s226 = scalar_select %p223, %s224, %s225
      %p229 = pneg %p223
      %p230 = scmp.eq.s32.totalorder %s20, 1
      %p231 = por %p229, %p230
      %p232 = scmp.ne.s32.totalorder %s224, %s227
      %p233 = scmp.eq.s32.totalorder %s20, 0
      %p234 = por %p232, %p233
      %p235 = scmp.ne.s32.totalorder %s224, %s227
      %p236 = scmp.eq.s32.totalorder %s25, 1
      %p237 = por %p235, %p236
      %p238 = scmp.ne.s32.totalorder %s227, %s228
      %p239 = scmp.eq.s32.totalorder %s25, 0
      %p240 = por %p238, %p239
      %p241 = scmp.ne.s32.totalorder %s227, %s228
      %p242 = scmp.eq.s32.totalorder %s26, 1
      %p243 = por %p241, %p242
      %p245 = scmp.ne.s32.totalorder %s228, %s244
      %p246 = scmp.eq.s32.totalorder %s26, 0
      %p247 = por %p245, %p246
      %p248 = scmp.le.s32.totalorder 1, %s20
      %p249 = scmp.lt.s32.totalorder %s20, 3
      %p250 = pnand %p248, %p249
      %p251 = pneg %p250
      // Predicated region
      $region9: #{tpu_custom_call.1} parent=5 // pred_check
        _
      $region10: #{tpu_custom_call.1} parent=5 // pred_check_branch
        %253 = sbr.rel (%p250) target = $region12
      $region11: #{tpu_custom_call.1} parent=5 // pred_region
        %s254 = ssub.s32 %s20, 1
        // Predicated region
        $region13: #{tpu_custom_call.1} parent=11 // pred_check
          %p255 = pneg %p67
        $region14: #{tpu_custom_call.1} parent=11 // pred_check_branch
          %257 = sbr.rel (%p255) target = $region16
        $region15: #{tpu_custom_call.1} parent=11 // pred_region
          _
        $region16: #{tpu_custom_call.1} parent=11 // pred_fallthru
          _
        // Predicated region
        $region17: #{tpu_custom_call.1} parent=11 // pred_check
          %p258 = pneg %p88
        $region18: #{tpu_custom_call.1} parent=11 // pred_check_branch
          %260 = sbr.rel (%p258) target = $region20
        $region19: #{tpu_custom_call.1} parent=11 // pred_region
          _
        $region20: #{tpu_custom_call.1} parent=11 // pred_fallthru
          _
        // Predicated region
        $region21: #{tpu_custom_call.1} parent=11 // pred_check
          %p261 = pneg %p109
        $region22: #{tpu_custom_call.1} parent=11 // pred_check_branch
          %263 = sbr.rel (%p261) target = $region24
        $region23: #{tpu_custom_call.1} parent=11 // pred_region
          _
        $region24: #{tpu_custom_call.1} parent=11 // pred_fallthru
          _
        // Predicated region
        $region25: #{tpu_custom_call.1} parent=11 // pred_check
          %p264 = pneg %p130
        $region26: #{tpu_custom_call.1} parent=11 // pred_check_branch
          %266 = sbr.rel (%p264) target = $region28
        $region27: #{tpu_custom_call.1} parent=11 // pred_region
          _
        $region28: #{tpu_custom_call.1} parent=11 // pred_fallthru
          _
        // Predicated region
        $region29: #{tpu_custom_call.1} parent=11 // pred_check
          %p267 = pneg %p151
        $region30: #{tpu_custom_call.1} parent=11 // pred_check_branch
          %269 = sbr.rel (%p267) target = $region32
        $region31: #{tpu_custom_call.1} parent=11 // pred_region
          _
        $region32: #{tpu_custom_call.1} parent=11 // pred_fallthru
          _
        // Predicated region
        $region33: #{tpu_custom_call.1} parent=11 // pred_check
          %p270 = pneg %p172
        $region34: #{tpu_custom_call.1} parent=11 // pred_check_branch
          %272 = sbr.rel (%p270) target = $region36
        $region35: #{tpu_custom_call.1} parent=11 // pred_region
          _
        $region36: #{tpu_custom_call.1} parent=11 // pred_fallthru
          _
        // Predicated region
        $region37: #{tpu_custom_call.1} parent=11 // pred_check
          %p273 = pneg %p193
        $region38: #{tpu_custom_call.1} parent=11 // pred_check_branch
          %275 = sbr.rel (%p273) target = $region40
        $region39: #{tpu_custom_call.1} parent=11 // pred_region
          _
        $region40: #{tpu_custom_call.1} parent=11 // pred_fallthru
          _
        // Predicated region
        $region41: #{tpu_custom_call.1} parent=11 // pred_check
          %p276 = pneg %p214
        $region42: #{tpu_custom_call.1} parent=11 // pred_check_branch
          %278 = sbr.rel (%p276) target = $region44
        $region43: #{tpu_custom_call.1} parent=11 // pred_region
          _
        $region44: #{tpu_custom_call.1} parent=11 // pred_fallthru
          _
      $region12: #{tpu_custom_call.1} parent=5 // pred_fallthru
        _
      %p279 = scmp.lt.s32.totalorder %s20, 2
      // Predicated region
      $region45: #{tpu_custom_call.1} parent=5 // pred_check
        %p280 = pneg %p279
      $region46: #{tpu_custom_call.1} parent=5 // pred_check_branch
        %282 = sbr.rel (%p280) target = $region48
      $region47: #{tpu_custom_call.1} parent=5 // pred_region
        // Predicated region
        $region49: #{tpu_custom_call.1} parent=47 // pred_check
          %p283 = pneg %p40
        $region50: #{tpu_custom_call.1} parent=47 // pred_check_branch
          %285 = sbr.rel (%p283) target = $region52
        $region51: #{tpu_custom_call.1} parent=47 // pred_region
          %s286 = smul.u32 4, %s20
          %p287 = scmp.lt.s32.totalorder %s286, 7
          %s288 = scalar_select %p287, %s286, 7
          %s289 = smul.addr %s288, 4
          %s290 = scalar_lea.vmem %s0, %s289
          %s291 = smul.u32 4, %s20
        $region52: #{tpu_custom_call.1} parent=47 // pred_fallthru
          _
      $region48: #{tpu_custom_call.1} parent=5 // pred_fallthru
        _
      %p292 = scmp.le.s32.totalorder 1, %s20
      %p293 = scmp.lt.s32.totalorder %s20, 3
      %p294 = pnand %p292, %p293
      %p295 = pneg %p294
      // Predicated region
      $region53: #{tpu_custom_call.1} parent=5 // pred_check
        _
      $region54: #{tpu_custom_call.1} parent=5 // pred_check_branch
        %297 = sbr.rel (%p294) target = $region56
      $region55: #{tpu_custom_call.1} parent=5 // pred_region
        %s298 = ssub.s32 %s20, 1
        %s299 = smul.u32 4, %s25
        %p300 = scmp.lt.s32.totalorder %s299, 7
        %s301 = scalar_select %p300, %s299, 7
        %s302 = smul.addr %s301, 4
        %s303 = scalar_lea.vmem %s0, %s302
        %p304 = pneg %p46
        %p305 = pneg %p43
        %p306 = pneg %p67
        %p307 = pneg %p64
        %p308 = pneg %p88
        %p309 = pneg %p85
        %p310 = pneg %p109
        %p311 = pneg %p106
        %p312 = pneg %p130
        %p313 = pneg %p127
        %p314 = pneg %p151
        %p315 = pneg %p148
        %p316 = pneg %p172
        %p317 = pneg %p169
        %p318 = pneg %p193
        %p319 = pneg %p190
        %p320 = pneg %p214
        %p321 = pneg %p211
        %p322 = pneg %p240
        %p323 = pneg %p237
        %s324 = sand.u32 %s227, 1
        %s325 = scalar_lea.sflag [#allocation4], %s324
        %s326 = sand.u32 %s227, 1
        %s327 = smul.addr %s326, 4
        %s328 = scalar_lea.vmem [#allocation3], %s327
        %s329 = smul.u32 4, %s25
        %p330 = scmp.lt.s32.totalorder %s329, 7
        %s331 = scalar_select %p330, %s329, 7
        %s332 = smul.addr %s331, 4
        %s333 = scalar_lea.vmem %s0, %s332
        %s334 = smul.u32 4, %s25
        %s335 = smul.u32 4, %s25
        %v336 = vld [vmem:[%s2] sm:$0xff]
        %v337 = vld [vmem:[%s2 + $0x8] sm:$0x3]
        %339 = vset.pattern.permute.xlu0 0
        %340 = vperm.xlu0 %339, %v336
        %v341 = vpop.permute.xlu0 %340
        %344 = vset.pattern.permute.xlu0 0
        %345 = vperm.xlu0 %344, %v337
        %v346 = vpop.permute.xlu0 %345
        %v348 = vld [vmem:[%s4] sm:$0xff]
        %v349 = vld [vmem:[%s4 + $0x8] sm:$0x3]
        %351 = vset.pattern.permute.xlu0 0
        %352 = vperm.xlu0 %351, %v348
        %v353 = vpop.permute.xlu0 %352
        %356 = vset.pattern.permute.xlu0 0
        %357 = vperm.xlu0 %356, %v349
        %v358 = vpop.permute.xlu0 %357
        %v360 = vld [vmem:[%s6] sm:$0xff]
        %v361 = vld [vmem:[%s6 + $0x8] sm:$0x3]
        %363 = vset.pattern.permute.xlu0 0
        %364 = vperm.xlu0 %363, %v360
        %v365 = vpop.permute.xlu0 %364
        %368 = vset.pattern.permute.xlu0 0
        %369 = vperm.xlu0 %368, %v361
        %v370 = vpop.permute.xlu0 %369
        %v372 = vld [vmem:[%s7] sm:$0xff]
        %v373 = vld [vmem:[%s7 + $0x8] sm:$0x3]
        %v374 = vld [vmem:[#allocation2] sm:$0x1]
        %v375 = vld [vmem:[%s333] sm:$0x77]
        %v376 = vld [vmem:[%s333 + $0x8] sm:$0x77]
        %v377 = vld [vmem:[%s1] sm:$0xff]
        %v378 = vld [vmem:[%s1 + $0x8] sm:$0x3]
        %380 = vset.pattern.permute.xlu0 0
        %381 = vperm.xlu0 %380, %v377
        %v382 = vpop.permute.xlu0 %381
        %385 = vset.pattern.permute.xlu0 0
        %386 = vperm.xlu0 %385, %v378
        %v387 = vpop.permute.xlu0 %386
        %v391 = vlaneseq
        %v392 = vshrl.u32 %v391, 7
        %v393 = vsub.s32 0, %v392
        %v394 = vrot.slane %v375, %v393
        %v395 = vlaneseq
        %v396 = vshrl.u32 %v395, 7
        %v397 = vsub.s32 4, %v396
        %v398 = vrot.slane %v375, %v397
        %v399 = vlaneseq
        %v400 = vshrl.u32 %v399, 7
        %v401 = vsub.s32 0, %v400
        %v402 = vrot.slane %v376, %v401
        %v403 = vlaneseq
        %v404 = vshrl.u32 %v403, 7
        %v405 = vsub.s32 4, %v404
        %v406 = vrot.slane %v376, %v405
        %v411 = vlaneseq
        %v412 = vshrl.u32 %v411, 7
        %v413 = vsub.s32 0, %v412
        %v414 = vrot.slane %v394, %v413
        %v415 = vlaneseq
        %v416 = vshrl.u32 %v415, 7
        %v417 = vsub.s32 0, %v416
        %v418 = vrot.slane %v398, %v417
        %v419 = vlaneseq
        %v420 = vshrl.u32 %v419, 7
        %v421 = vsub.s32 0, %v420
        %v422 = vrot.slane %v402, %v421
        %v423 = vlaneseq
        %v424 = vshrl.u32 %v423, 7
        %v425 = vsub.s32 0, %v424
        %v426 = vrot.slane %v406, %v425
        %v427 = vmul.f32 %v382, %v414
        %v428 = vmul.f32 %v382, %v418
        %v429 = vmul.f32 %v382, %v422
        %v430 = vmul.f32 %v382, %v426
        %v431 = vmul.f32 %v387, %v414
        %v432 = vmul.f32 %v387, %v418
        %v433 = vmul.f32 %v387, %v422
        %v434 = vmul.f32 %v387, %v426
        %v435 = vadd.f32 %v341, %v427
        %v436 = vadd.f32 %v341, %v428
        %v437 = vadd.f32 %v341, %v429
        %v438 = vadd.f32 %v341, %v430
        %v439 = vadd.f32 %v346, %v431
        %v440 = vadd.f32 %v346, %v432
        %v441 = vadd.f32 %v346, %v433
        %v442 = vadd.f32 %v346, %v434
        %443 = vset.pattern.permute.xlu0 1
        %444 = vperm.xlu0 %443, %v377
        %v445 = vpop.permute.xlu0 %444
        %447 = vset.pattern.permute.xlu0 1
        %448 = vperm.xlu0 %447, %v378
        %v449 = vpop.permute.xlu0 %448
        %v451 = vlaneseq
        %v452 = vshrl.u32 %v451, 7
        %v453 = vsub.s32 1, %v452
        %v454 = vrot.slane %v375, %v453
        %v455 = vlaneseq
        %v456 = vshrl.u32 %v455, 7
        %v457 = vsub.s32 5, %v456
        %v458 = vrot.slane %v375, %v457
        %v459 = vlaneseq
        %v460 = vshrl.u32 %v459, 7
        %v461 = vsub.s32 1, %v460
        %v462 = vrot.slane %v376, %v461
        %v463 = vlaneseq
        %v464 = vshrl.u32 %v463, 7
        %v465 = vsub.s32 5, %v464
        %v466 = vrot.slane %v376, %v465
        %v471 = vlaneseq
        %v472 = vshrl.u32 %v471, 7
        %v473 = vsub.s32 1, %v472
        %v474 = vrot.slane %v454, %v473
        %v475 = vlaneseq
        %v476 = vshrl.u32 %v475, 7
        %v477 = vsub.s32 1, %v476
        %v478 = vrot.slane %v458, %v477
        %v479 = vlaneseq
        %v480 = vshrl.u32 %v479, 7
        %v481 = vsub.s32 1, %v480
        %v482 = vrot.slane %v462, %v481
        %v483 = vlaneseq
        %v484 = vshrl.u32 %v483, 7
        %v485 = vsub.s32 1, %v484
        %v486 = vrot.slane %v466, %v485
        %v487 = vmul.f32 %v445, %v474
        %v488 = vmul.f32 %v445, %v478
        %v489 = vmul.f32 %v445, %v482
        %v490 = vmul.f32 %v445, %v486
        %v491 = vmul.f32 %v449, %v474
        %v492 = vmul.f32 %v449, %v478
        %v493 = vmul.f32 %v449, %v482
        %v494 = vmul.f32 %v449, %v486
        %v495 = vadd.f32 %v435, %v487
        %v496 = vadd.f32 %v436, %v488
        %v497 = vadd.f32 %v437, %v489
        %v498 = vadd.f32 %v438, %v490
        %v499 = vadd.f32 %v439, %v491
        %v500 = vadd.f32 %v440, %v492
        %v501 = vadd.f32 %v441, %v493
        %v502 = vadd.f32 %v442, %v494
        %503 = vset.pattern.permute.xlu0 2
        %504 = vperm.xlu0 %503, %v377
        %v505 = vpop.permute.xlu0 %504
        %507 = vset.pattern.permute.xlu0 2
        %508 = vperm.xlu0 %507, %v378
        %v509 = vpop.permute.xlu0 %508
        %v511 = vlaneseq
        %v512 = vshrl.u32 %v511, 7
        %v513 = vsub.s32 2, %v512
        %v514 = vrot.slane %v375, %v513
        %v515 = vlaneseq
        %v516 = vshrl.u32 %v515, 7
        %v517 = vsub.s32 6, %v516
        %v518 = vrot.slane %v375, %v517
        %v519 = vlaneseq
        %v520 = vshrl.u32 %v519, 7
        %v521 = vsub.s32 2, %v520
        %v522 = vrot.slane %v376, %v521
        %v523 = vlaneseq
        %v524 = vshrl.u32 %v523, 7
        %v525 = vsub.s32 6, %v524
        %v526 = vrot.slane %v376, %v525
        %v531 = vlaneseq
        %v532 = vshrl.u32 %v531, 7
        %v533 = vsub.s32 2, %v532
        %v534 = vrot.slane %v514, %v533
        %v535 = vlaneseq
        %v536 = vshrl.u32 %v535, 7
        %v537 = vsub.s32 2, %v536
        %v538 = vrot.slane %v518, %v537
        %v539 = vlaneseq
        %v540 = vshrl.u32 %v539, 7
        %v541 = vsub.s32 2, %v540
        %v542 = vrot.slane %v522, %v541
        %v543 = vlaneseq
        %v544 = vshrl.u32 %v543, 7
        %v545 = vsub.s32 2, %v544
        %v546 = vrot.slane %v526, %v545
        %v547 = vmul.f32 %v505, %v534
        %v548 = vmul.f32 %v505, %v538
        %v549 = vmul.f32 %v505, %v542
        %v550 = vmul.f32 %v505, %v546
        %v551 = vmul.f32 %v509, %v534
        %v552 = vmul.f32 %v509, %v538
        %v553 = vmul.f32 %v509, %v542
        %v554 = vmul.f32 %v509, %v546
        %v555 = vadd.f32 %v495, %v547
        %v556 = vadd.f32 %v496, %v548
        %v557 = vadd.f32 %v497, %v549
        %v558 = vadd.f32 %v498, %v550
        %v559 = vadd.f32 %v499, %v551
        %v560 = vadd.f32 %v500, %v552
        %v561 = vadd.f32 %v501, %v553
        %v562 = vadd.f32 %v502, %v554
        %v563 = vmax.f32 %v555, 0.0
        %v564 = vmax.f32 %v556, 0.0
        %v565 = vmax.f32 %v557, 0.0
        %v566 = vmax.f32 %v558, 0.0
        %v567 = vmax.f32 %v559, 0.0
        %v568 = vmax.f32 %v560, 0.0
        %v569 = vmax.f32 %v561, 0.0
        %v570 = vmax.f32 %v562, 0.0
        %v571 = vld [vmem:[%s3] sm:$0xff]
        %v572 = vld [vmem:[%s3 + $0x8] sm:$0x3]
        %574 = vset.pattern.permute.xlu0 0
        %575 = vperm.xlu0 %574, %v571
        %v576 = vpop.permute.xlu0 %575
        %579 = vset.pattern.permute.xlu0 0
        %580 = vperm.xlu0 %579, %v572
        %v581 = vpop.permute.xlu0 %580
        %v583 = vlaneseq
        %v584 = vshrl.u32 %v583, 7
        %v585 = vsub.s32 0, %v584
        %v586 = vrot.slane %v563, %v585
        %v587 = vlaneseq
        %v588 = vshrl.u32 %v587, 7
        %v589 = vsub.s32 0, %v588
        %v590 = vrot.slane %v564, %v589
        %v591 = vlaneseq
        %v592 = vshrl.u32 %v591, 7
        %v593 = vsub.s32 0, %v592
        %v594 = vrot.slane %v565, %v593
        %v595 = vlaneseq
        %v596 = vshrl.u32 %v595, 7
        %v597 = vsub.s32 0, %v596
        %v598 = vrot.slane %v566, %v597
        %v599 = vmul.f32 %v576, %v586
        %v600 = vmul.f32 %v576, %v590
        %v601 = vmul.f32 %v576, %v594
        %v602 = vmul.f32 %v576, %v598
        %v603 = vmul.f32 %v581, %v586
        %v604 = vmul.f32 %v581, %v590
        %v605 = vmul.f32 %v581, %v594
        %v606 = vmul.f32 %v581, %v598
        %v607 = vadd.f32 %v353, %v599
        %v608 = vadd.f32 %v353, %v600
        %v609 = vadd.f32 %v353, %v601
        %v610 = vadd.f32 %v353, %v602
        %v611 = vadd.f32 %v358, %v603
        %v612 = vadd.f32 %v358, %v604
        %v613 = vadd.f32 %v358, %v605
        %v614 = vadd.f32 %v358, %v606
        %615 = vset.pattern.permute.xlu0 1
        %616 = vperm.xlu0 %615, %v571
        %v617 = vpop.permute.xlu0 %616
        %619 = vset.pattern.permute.xlu0 1
        %620 = vperm.xlu0 %619, %v572
        %v621 = vpop.permute.xlu0 %620
        %v623 = vlaneseq
        %v624 = vshrl.u32 %v623, 7
        %v625 = vsub.s32 1, %v624
        %v626 = vrot.slane %v563, %v625
        %v627 = vlaneseq
        %v628 = vshrl.u32 %v627, 7
        %v629 = vsub.s32 1, %v628
        %v630 = vrot.slane %v564, %v629
        %v631 = vlaneseq
        %v632 = vshrl.u32 %v631, 7
        %v633 = vsub.s32 1, %v632
        %v634 = vrot.slane %v565, %v633
        %v635 = vlaneseq
        %v636 = vshrl.u32 %v635, 7
        %v637 = vsub.s32 1, %v636
        %v638 = vrot.slane %v566, %v637
        %v639 = vmul.f32 %v617, %v626
        %v640 = vmul.f32 %v617, %v630
        %v641 = vmul.f32 %v617, %v634
        %v642 = vmul.f32 %v617, %v638
        %v643 = vmul.f32 %v621, %v626
        %v644 = vmul.f32 %v621, %v630
        %v645 = vmul.f32 %v621, %v634
        %v646 = vmul.f32 %v621, %v638
        %v647 = vadd.f32 %v607, %v639
        %v648 = vadd.f32 %v608, %v640
        %v649 = vadd.f32 %v609, %v641
        %v650 = vadd.f32 %v610, %v642
        %v651 = vadd.f32 %v611, %v643
        %v652 = vadd.f32 %v612, %v644
        %v653 = vadd.f32 %v613, %v645
        %v654 = vadd.f32 %v614, %v646
        %655 = vset.pattern.permute.xlu0 2
        %656 = vperm.xlu0 %655, %v571
        %v657 = vpop.permute.xlu0 %656
        %659 = vset.pattern.permute.xlu0 2
        %660 = vperm.xlu0 %659, %v572
        %v661 = vpop.permute.xlu0 %660
        %v663 = vlaneseq
        %v664 = vshrl.u32 %v663, 7
        %v665 = vsub.s32 2, %v664
        %v666 = vrot.slane %v563, %v665
        %v667 = vlaneseq
        %v668 = vshrl.u32 %v667, 7
        %v669 = vsub.s32 2, %v668
        %v670 = vrot.slane %v564, %v669
        %v671 = vlaneseq
        %v672 = vshrl.u32 %v671, 7
        %v673 = vsub.s32 2, %v672
        %v674 = vrot.slane %v565, %v673
        %v675 = vlaneseq
        %v676 = vshrl.u32 %v675, 7
        %v677 = vsub.s32 2, %v676
        %v678 = vrot.slane %v566, %v677
        %v679 = vmul.f32 %v657, %v666
        %v680 = vmul.f32 %v657, %v670
        %v681 = vmul.f32 %v657, %v674
        %v682 = vmul.f32 %v657, %v678
        %v683 = vmul.f32 %v661, %v666
        %v684 = vmul.f32 %v661, %v670
        %v685 = vmul.f32 %v661, %v674
        %v686 = vmul.f32 %v661, %v678
        %v687 = vadd.f32 %v647, %v679
        %v688 = vadd.f32 %v648, %v680
        %v689 = vadd.f32 %v649, %v681
        %v690 = vadd.f32 %v650, %v682
        %v691 = vadd.f32 %v651, %v683
        %v692 = vadd.f32 %v652, %v684
        %v693 = vadd.f32 %v653, %v685
        %v694 = vadd.f32 %v654, %v686
        %695 = vset.pattern.permute.xlu0 3
        %696 = vperm.xlu0 %695, %v571
        %v697 = vpop.permute.xlu0 %696
        %699 = vset.pattern.permute.xlu0 3
        %700 = vperm.xlu0 %699, %v572
        %v701 = vpop.permute.xlu0 %700
        %v703 = vlaneseq
        %v704 = vshrl.u32 %v703, 7
        %v705 = vsub.s32 3, %v704
        %v706 = vrot.slane %v563, %v705
        %v707 = vlaneseq
        %v708 = vshrl.u32 %v707, 7
        %v709 = vsub.s32 3, %v708
        %v710 = vrot.slane %v564, %v709
        %v711 = vlaneseq
        %v712 = vshrl.u32 %v711, 7
        %v713 = vsub.s32 3, %v712
        %v714 = vrot.slane %v565, %v713
        %v715 = vlaneseq
        %v716 = vshrl.u32 %v715, 7
        %v717 = vsub.s32 3, %v716
        %v718 = vrot.slane %v566, %v717
        %v719 = vmul.f32 %v697, %v706
        %v720 = vmul.f32 %v697, %v710
        %v721 = vmul.f32 %v697, %v714
        %v722 = vmul.f32 %v697, %v718
        %v723 = vmul.f32 %v701, %v706
        %v724 = vmul.f32 %v701, %v710
        %v725 = vmul.f32 %v701, %v714
        %v726 = vmul.f32 %v701, %v718
        %v727 = vadd.f32 %v687, %v719
        %v728 = vadd.f32 %v688, %v720
        %v729 = vadd.f32 %v689, %v721
        %v730 = vadd.f32 %v690, %v722
        %v731 = vadd.f32 %v691, %v723
        %v732 = vadd.f32 %v692, %v724
        %v733 = vadd.f32 %v693, %v725
        %v734 = vadd.f32 %v694, %v726
        %735 = vset.pattern.permute.xlu0 4
        %736 = vperm.xlu0 %735, %v571
        %v737 = vpop.permute.xlu0 %736
        %739 = vset.pattern.permute.xlu0 4
        %740 = vperm.xlu0 %739, %v572
        %v741 = vpop.permute.xlu0 %740
        %v743 = vlaneseq
        %v744 = vshrl.u32 %v743, 7
        %v745 = vsub.s32 4, %v744
        %v746 = vrot.slane %v563, %v745
        %v747 = vlaneseq
        %v748 = vshrl.u32 %v747, 7
        %v749 = vsub.s32 4, %v748
        %v750 = vrot.slane %v564, %v749
        %v751 = vlaneseq
        %v752 = vshrl.u32 %v751, 7
        %v753 = vsub.s32 4, %v752
        %v754 = vrot.slane %v565, %v753
        %v755 = vlaneseq
        %v756 = vshrl.u32 %v755, 7
        %v757 = vsub.s32 4, %v756
        %v758 = vrot.slane %v566, %v757
        %v759 = vmul.f32 %v737, %v746
        %v760 = vmul.f32 %v737, %v750
        %v761 = vmul.f32 %v737, %v754
        %v762 = vmul.f32 %v737, %v758
        %v763 = vmul.f32 %v741, %v746
        %v764 = vmul.f32 %v741, %v750
        %v765 = vmul.f32 %v741, %v754
        %v766 = vmul.f32 %v741, %v758
        %v767 = vadd.f32 %v727, %v759
        %v768 = vadd.f32 %v728, %v760
        %v769 = vadd.f32 %v729, %v761
        %v770 = vadd.f32 %v730, %v762
        %v771 = vadd.f32 %v731, %v763
        %v772 = vadd.f32 %v732, %v764
        %v773 = vadd.f32 %v733, %v765
        %v774 = vadd.f32 %v734, %v766
        %775 = vset.pattern.permute.xlu0 5
        %776 = vperm.xlu0 %775, %v571
        %v777 = vpop.permute.xlu0 %776
        %779 = vset.pattern.permute.xlu0 5
        %780 = vperm.xlu0 %779, %v572
        %v781 = vpop.permute.xlu0 %780
        %v783 = vlaneseq
        %v784 = vshrl.u32 %v783, 7
        %v785 = vsub.s32 5, %v784
        %v786 = vrot.slane %v563, %v785
        %v787 = vlaneseq
        %v788 = vshrl.u32 %v787, 7
        %v789 = vsub.s32 5, %v788
        %v790 = vrot.slane %v564, %v789
        %v791 = vlaneseq
        %v792 = vshrl.u32 %v791, 7
        %v793 = vsub.s32 5, %v792
        %v794 = vrot.slane %v565, %v793
        %v795 = vlaneseq
        %v796 = vshrl.u32 %v795, 7
        %v797 = vsub.s32 5, %v796
        %v798 = vrot.slane %v566, %v797
        %v799 = vmul.f32 %v777, %v786
        %v800 = vmul.f32 %v777, %v790
        %v801 = vmul.f32 %v777, %v794
        %v802 = vmul.f32 %v777, %v798
        %v803 = vmul.f32 %v781, %v786
        %v804 = vmul.f32 %v781, %v790
        %v805 = vmul.f32 %v781, %v794
        %v806 = vmul.f32 %v781, %v798
        %v807 = vadd.f32 %v767, %v799
        %v808 = vadd.f32 %v768, %v800
        %v809 = vadd.f32 %v769, %v801
        %v810 = vadd.f32 %v770, %v802
        %v811 = vadd.f32 %v771, %v803
        %v812 = vadd.f32 %v772, %v804
        %v813 = vadd.f32 %v773, %v805
        %v814 = vadd.f32 %v774, %v806
        %815 = vset.pattern.permute.xlu0 6
        %816 = vperm.xlu0 %815, %v571
        %v817 = vpop.permute.xlu0 %816
        %819 = vset.pattern.permute.xlu0 6
        %820 = vperm.xlu0 %819, %v572
        %v821 = vpop.permute.xlu0 %820
        %v823 = vlaneseq
        %v824 = vshrl.u32 %v823, 7
        %v825 = vsub.s32 6, %v824
        %v826 = vrot.slane %v563, %v825
        %v827 = vlaneseq
        %v828 = vshrl.u32 %v827, 7
        %v829 = vsub.s32 6, %v828
        %v830 = vrot.slane %v564, %v829
        %v831 = vlaneseq
        %v832 = vshrl.u32 %v831, 7
        %v833 = vsub.s32 6, %v832
        %v834 = vrot.slane %v565, %v833
        %v835 = vlaneseq
        %v836 = vshrl.u32 %v835, 7
        %v837 = vsub.s32 6, %v836
        %v838 = vrot.slane %v566, %v837
        %v839 = vmul.f32 %v817, %v826
        %v840 = vmul.f32 %v817, %v830
        %v841 = vmul.f32 %v817, %v834
        %v842 = vmul.f32 %v817, %v838
        %v843 = vmul.f32 %v821, %v826
        %v844 = vmul.f32 %v821, %v830
        %v845 = vmul.f32 %v821, %v834
        %v846 = vmul.f32 %v821, %v838
        %v847 = vadd.f32 %v807, %v839
        %v848 = vadd.f32 %v808, %v840
        %v849 = vadd.f32 %v809, %v841
        %v850 = vadd.f32 %v810, %v842
        %v851 = vadd.f32 %v811, %v843
        %v852 = vadd.f32 %v812, %v844
        %v853 = vadd.f32 %v813, %v845
        %v854 = vadd.f32 %v814, %v846
        %855 = vset.pattern.permute.xlu0 7
        %856 = vperm.xlu0 %855, %v571
        %v857 = vpop.permute.xlu0 %856
        %859 = vset.pattern.permute.xlu0 7
        %860 = vperm.xlu0 %859, %v572
        %v861 = vpop.permute.xlu0 %860
        %v863 = vlaneseq
        %v864 = vshrl.u32 %v863, 7
        %v865 = vsub.s32 7, %v864
        %v866 = vrot.slane %v563, %v865
        %v867 = vlaneseq
        %v868 = vshrl.u32 %v867, 7
        %v869 = vsub.s32 7, %v868
        %v870 = vrot.slane %v564, %v869
        %v871 = vlaneseq
        %v872 = vshrl.u32 %v871, 7
        %v873 = vsub.s32 7, %v872
        %v874 = vrot.slane %v565, %v873
        %v875 = vlaneseq
        %v876 = vshrl.u32 %v875, 7
        %v877 = vsub.s32 7, %v876
        %v878 = vrot.slane %v566, %v877
        %v879 = vmul.f32 %v857, %v866
        %v880 = vmul.f32 %v857, %v870
        %v881 = vmul.f32 %v857, %v874
        %v882 = vmul.f32 %v857, %v878
        %v883 = vmul.f32 %v861, %v866
        %v884 = vmul.f32 %v861, %v870
        %v885 = vmul.f32 %v861, %v874
        %v886 = vmul.f32 %v861, %v878
        %v887 = vadd.f32 %v847, %v879
        %v888 = vadd.f32 %v848, %v880
        %v889 = vadd.f32 %v849, %v881
        %v890 = vadd.f32 %v850, %v882
        %v891 = vadd.f32 %v851, %v883
        %v892 = vadd.f32 %v852, %v884
        %v893 = vadd.f32 %v853, %v885
        %v894 = vadd.f32 %v854, %v886
        %895 = vset.pattern.permute.xlu0 8
        %896 = vperm.xlu0 %895, %v571
        %v897 = vpop.permute.xlu0 %896
        %899 = vset.pattern.permute.xlu0 8
        %900 = vperm.xlu0 %899, %v572
        %v901 = vpop.permute.xlu0 %900
        %v903 = vlaneseq
        %v904 = vshrl.u32 %v903, 7
        %v905 = vsub.s32 0, %v904
        %v906 = vrot.slane %v567, %v905
        %v907 = vlaneseq
        %v908 = vshrl.u32 %v907, 7
        %v909 = vsub.s32 0, %v908
        %v910 = vrot.slane %v568, %v909
        %v911 = vlaneseq
        %v912 = vshrl.u32 %v911, 7
        %v913 = vsub.s32 0, %v912
        %v914 = vrot.slane %v569, %v913
        %v915 = vlaneseq
        %v916 = vshrl.u32 %v915, 7
        %v917 = vsub.s32 0, %v916
        %v918 = vrot.slane %v570, %v917
        %v919 = vmul.f32 %v897, %v906
        %v920 = vmul.f32 %v897, %v910
        %v921 = vmul.f32 %v897, %v914
        %v922 = vmul.f32 %v897, %v918
        %v923 = vmul.f32 %v901, %v906
        %v924 = vmul.f32 %v901, %v910
        %v925 = vmul.f32 %v901, %v914
        %v926 = vmul.f32 %v901, %v918
        %v927 = vadd.f32 %v887, %v919
        %v928 = vadd.f32 %v888, %v920
        %v929 = vadd.f32 %v889, %v921
        %v930 = vadd.f32 %v890, %v922
        %v931 = vadd.f32 %v891, %v923
        %v932 = vadd.f32 %v892, %v924
        %v933 = vadd.f32 %v893, %v925
        %v934 = vadd.f32 %v894, %v926
        %935 = vset.pattern.permute.xlu0 9
        %936 = vperm.xlu0 %935, %v571
        %v937 = vpop.permute.xlu0 %936
        %939 = vset.pattern.permute.xlu0 9
        %940 = vperm.xlu0 %939, %v572
        %v941 = vpop.permute.xlu0 %940
        %v943 = vlaneseq
        %v944 = vshrl.u32 %v943, 7
        %v945 = vsub.s32 1, %v944
        %v946 = vrot.slane %v567, %v945
        %v947 = vlaneseq
        %v948 = vshrl.u32 %v947, 7
        %v949 = vsub.s32 1, %v948
        %v950 = vrot.slane %v568, %v949
        %v951 = vlaneseq
        %v952 = vshrl.u32 %v951, 7
        %v953 = vsub.s32 1, %v952
        %v954 = vrot.slane %v569, %v953
        %v955 = vlaneseq
        %v956 = vshrl.u32 %v955, 7
        %v957 = vsub.s32 1, %v956
        %v958 = vrot.slane %v570, %v957
        %v959 = vmul.f32 %v937, %v946
        %v960 = vmul.f32 %v937, %v950
        %v961 = vmul.f32 %v937, %v954
        %v962 = vmul.f32 %v937, %v958
        %v963 = vmul.f32 %v941, %v946
        %v964 = vmul.f32 %v941, %v950
        %v965 = vmul.f32 %v941, %v954
        %v966 = vmul.f32 %v941, %v958
        %v967 = vadd.f32 %v927, %v959
        %v968 = vadd.f32 %v928, %v960
        %v969 = vadd.f32 %v929, %v961
        %v970 = vadd.f32 %v930, %v962
        %v971 = vadd.f32 %v931, %v963
        %v972 = vadd.f32 %v932, %v964
        %v973 = vadd.f32 %v933, %v965
        %v974 = vadd.f32 %v934, %v966
        %v975 = vmax.f32 %v967, 0.0
        %v976 = vmax.f32 %v968, 0.0
        %v977 = vmax.f32 %v969, 0.0
        %v978 = vmax.f32 %v970, 0.0
        %v979 = vmax.f32 %v971, 0.0
        %v980 = vmax.f32 %v972, 0.0
        %v981 = vmax.f32 %v973, 0.0
        %v982 = vmax.f32 %v974, 0.0
        %v983 = vld [vmem:[%s5] sm:$0xff]
        %v984 = vld [vmem:[%s5 + $0x8] sm:$0x3]
        %986 = vset.pattern.permute.xlu0 0
        %987 = vperm.xlu0 %986, %v983
        %v988 = vpop.permute.xlu0 %987
        %991 = vset.pattern.permute.xlu0 0
        %992 = vperm.xlu0 %991, %v984
        %v993 = vpop.permute.xlu0 %992
        %v995 = vlaneseq
        %v996 = vshrl.u32 %v995, 7
        %v997 = vsub.s32 0, %v996
        %v998 = vrot.slane %v975, %v997
        %v999 = vlaneseq
        %v1000 = vshrl.u32 %v999, 7
        %v1001 = vsub.s32 0, %v1000
        %v1002 = vrot.slane %v976, %v1001
        %v1003 = vlaneseq
        %v1004 = vshrl.u32 %v1003, 7
        %v1005 = vsub.s32 0, %v1004
        %v1006 = vrot.slane %v977, %v1005
        %v1007 = vlaneseq
        %v1008 = vshrl.u32 %v1007, 7
        %v1009 = vsub.s32 0, %v1008
        %v1010 = vrot.slane %v978, %v1009
        %v1011 = vmul.f32 %v988, %v998
        %v1012 = vmul.f32 %v988, %v1002
        %v1013 = vmul.f32 %v988, %v1006
        %v1014 = vmul.f32 %v988, %v1010
        %v1015 = vmul.f32 %v993, %v998
        %v1016 = vmul.f32 %v993, %v1002
        %v1017 = vmul.f32 %v993, %v1006
        %v1018 = vmul.f32 %v993, %v1010
        %v1019 = vadd.f32 %v365, %v1011
        %v1020 = vadd.f32 %v365, %v1012
        %v1021 = vadd.f32 %v365, %v1013
        %v1022 = vadd.f32 %v365, %v1014
        %v1023 = vadd.f32 %v370, %v1015
        %v1024 = vadd.f32 %v370, %v1016
        %v1025 = vadd.f32 %v370, %v1017
        %v1026 = vadd.f32 %v370, %v1018
        %1027 = vset.pattern.permute.xlu0 1
        %1028 = vperm.xlu0 %1027, %v983
        %v1029 = vpop.permute.xlu0 %1028
        %1031 = vset.pattern.permute.xlu0 1
        %1032 = vperm.xlu0 %1031, %v984
        %v1033 = vpop.permute.xlu0 %1032
        %v1035 = vlaneseq
        %v1036 = vshrl.u32 %v1035, 7
        %v1037 = vsub.s32 1, %v1036
        %v1038 = vrot.slane %v975, %v1037
        %v1039 = vlaneseq
        %v1040 = vshrl.u32 %v1039, 7
        %v1041 = vsub.s32 1, %v1040
        %v1042 = vrot.slane %v976, %v1041
        %v1043 = vlaneseq
        %v1044 = vshrl.u32 %v1043, 7
        %v1045 = vsub.s32 1, %v1044
        %v1046 = vrot.slane %v977, %v1045
        %v1047 = vlaneseq
        %v1048 = vshrl.u32 %v1047, 7
        %v1049 = vsub.s32 1, %v1048
        %v1050 = vrot.slane %v978, %v1049
        %v1051 = vmul.f32 %v1029, %v1038
        %v1052 = vmul.f32 %v1029, %v1042
        %v1053 = vmul.f32 %v1029, %v1046
        %v1054 = vmul.f32 %v1029, %v1050
        %v1055 = vmul.f32 %v1033, %v1038
        %v1056 = vmul.f32 %v1033, %v1042
        %v1057 = vmul.f32 %v1033, %v1046
        %v1058 = vmul.f32 %v1033, %v1050
        %v1059 = vadd.f32 %v1019, %v1051
        %v1060 = vadd.f32 %v1020, %v1052
        %v1061 = vadd.f32 %v1021, %v1053
        %v1062 = vadd.f32 %v1022, %v1054
        %v1063 = vadd.f32 %v1023, %v1055
        %v1064 = vadd.f32 %v1024, %v1056
        %v1065 = vadd.f32 %v1025, %v1057
        %v1066 = vadd.f32 %v1026, %v1058
        %1067 = vset.pattern.permute.xlu0 2
        %1068 = vperm.xlu0 %1067, %v983
        %v1069 = vpop.permute.xlu0 %1068
        %1071 = vset.pattern.permute.xlu0 2
        %1072 = vperm.xlu0 %1071, %v984
        %v1073 = vpop.permute.xlu0 %1072
        %v1075 = vlaneseq
        %v1076 = vshrl.u32 %v1075, 7
        %v1077 = vsub.s32 2, %v1076
        %v1078 = vrot.slane %v975, %v1077
        %v1079 = vlaneseq
        %v1080 = vshrl.u32 %v1079, 7
        %v1081 = vsub.s32 2, %v1080
        %v1082 = vrot.slane %v976, %v1081
        %v1083 = vlaneseq
        %v1084 = vshrl.u32 %v1083, 7
        %v1085 = vsub.s32 2, %v1084
        %v1086 = vrot.slane %v977, %v1085
        %v1087 = vlaneseq
        %v1088 = vshrl.u32 %v1087, 7
        %v1089 = vsub.s32 2, %v1088
        %v1090 = vrot.slane %v978, %v1089
        %v1091 = vmul.f32 %v1069, %v1078
        %v1092 = vmul.f32 %v1069, %v1082
        %v1093 = vmul.f32 %v1069, %v1086
        %v1094 = vmul.f32 %v1069, %v1090
        %v1095 = vmul.f32 %v1073, %v1078
        %v1096 = vmul.f32 %v1073, %v1082
        %v1097 = vmul.f32 %v1073, %v1086
        %v1098 = vmul.f32 %v1073, %v1090
        %v1099 = vadd.f32 %v1059, %v1091
        %v1100 = vadd.f32 %v1060, %v1092
        %v1101 = vadd.f32 %v1061, %v1093
        %v1102 = vadd.f32 %v1062, %v1094
        %v1103 = vadd.f32 %v1063, %v1095
        %v1104 = vadd.f32 %v1064, %v1096
        %v1105 = vadd.f32 %v1065, %v1097
        %v1106 = vadd.f32 %v1066, %v1098
        %1107 = vset.pattern.permute.xlu0 3
        %1108 = vperm.xlu0 %1107, %v983
        %v1109 = vpop.permute.xlu0 %1108
        %1111 = vset.pattern.permute.xlu0 3
        %1112 = vperm.xlu0 %1111, %v984
        %v1113 = vpop.permute.xlu0 %1112
        %v1115 = vlaneseq
        %v1116 = vshrl.u32 %v1115, 7
        %v1117 = vsub.s32 3, %v1116
        %v1118 = vrot.slane %v975, %v1117
        %v1119 = vlaneseq
        %v1120 = vshrl.u32 %v1119, 7
        %v1121 = vsub.s32 3, %v1120
        %v1122 = vrot.slane %v976, %v1121
        %v1123 = vlaneseq
        %v1124 = vshrl.u32 %v1123, 7
        %v1125 = vsub.s32 3, %v1124
        %v1126 = vrot.slane %v977, %v1125
        %v1127 = vlaneseq
        %v1128 = vshrl.u32 %v1127, 7
        %v1129 = vsub.s32 3, %v1128
        %v1130 = vrot.slane %v978, %v1129
        %v1131 = vmul.f32 %v1109, %v1118
        %v1132 = vmul.f32 %v1109, %v1122
        %v1133 = vmul.f32 %v1109, %v1126
        %v1134 = vmul.f32 %v1109, %v1130
        %v1135 = vmul.f32 %v1113, %v1118
        %v1136 = vmul.f32 %v1113, %v1122
        %v1137 = vmul.f32 %v1113, %v1126
        %v1138 = vmul.f32 %v1113, %v1130
        %v1139 = vadd.f32 %v1099, %v1131
        %v1140 = vadd.f32 %v1100, %v1132
        %v1141 = vadd.f32 %v1101, %v1133
        %v1142 = vadd.f32 %v1102, %v1134
        %v1143 = vadd.f32 %v1103, %v1135
        %v1144 = vadd.f32 %v1104, %v1136
        %v1145 = vadd.f32 %v1105, %v1137
        %v1146 = vadd.f32 %v1106, %v1138
        %1147 = vset.pattern.permute.xlu0 4
        %1148 = vperm.xlu0 %1147, %v983
        %v1149 = vpop.permute.xlu0 %1148
        %1151 = vset.pattern.permute.xlu0 4
        %1152 = vperm.xlu0 %1151, %v984
        %v1153 = vpop.permute.xlu0 %1152
        %v1155 = vlaneseq
        %v1156 = vshrl.u32 %v1155, 7
        %v1157 = vsub.s32 4, %v1156
        %v1158 = vrot.slane %v975, %v1157
        %v1159 = vlaneseq
        %v1160 = vshrl.u32 %v1159, 7
        %v1161 = vsub.s32 4, %v1160
        %v1162 = vrot.slane %v976, %v1161
        %v1163 = vlaneseq
        %v1164 = vshrl.u32 %v1163, 7
        %v1165 = vsub.s32 4, %v1164
        %v1166 = vrot.slane %v977, %v1165
        %v1167 = vlaneseq
        %v1168 = vshrl.u32 %v1167, 7
        %v1169 = vsub.s32 4, %v1168
        %v1170 = vrot.slane %v978, %v1169
        %v1171 = vmul.f32 %v1149, %v1158
        %v1172 = vmul.f32 %v1149, %v1162
        %v1173 = vmul.f32 %v1149, %v1166
        %v1174 = vmul.f32 %v1149, %v1170
        %v1175 = vmul.f32 %v1153, %v1158
        %v1176 = vmul.f32 %v1153, %v1162
        %v1177 = vmul.f32 %v1153, %v1166
        %v1178 = vmul.f32 %v1153, %v1170
        %v1179 = vadd.f32 %v1139, %v1171
        %v1180 = vadd.f32 %v1140, %v1172
        %v1181 = vadd.f32 %v1141, %v1173
        %v1182 = vadd.f32 %v1142, %v1174
        %v1183 = vadd.f32 %v1143, %v1175
        %v1184 = vadd.f32 %v1144, %v1176
        %v1185 = vadd.f32 %v1145, %v1177
        %v1186 = vadd.f32 %v1146, %v1178
        %1187 = vset.pattern.permute.xlu0 5
        %1188 = vperm.xlu0 %1187, %v983
        %v1189 = vpop.permute.xlu0 %1188
        %1191 = vset.pattern.permute.xlu0 5
        %1192 = vperm.xlu0 %1191, %v984
        %v1193 = vpop.permute.xlu0 %1192
        %v1195 = vlaneseq
        %v1196 = vshrl.u32 %v1195, 7
        %v1197 = vsub.s32 5, %v1196
        %v1198 = vrot.slane %v975, %v1197
        %v1199 = vlaneseq
        %v1200 = vshrl.u32 %v1199, 7
        %v1201 = vsub.s32 5, %v1200
        %v1202 = vrot.slane %v976, %v1201
        %v1203 = vlaneseq
        %v1204 = vshrl.u32 %v1203, 7
        %v1205 = vsub.s32 5, %v1204
        %v1206 = vrot.slane %v977, %v1205
        %v1207 = vlaneseq
        %v1208 = vshrl.u32 %v1207, 7
        %v1209 = vsub.s32 5, %v1208
        %v1210 = vrot.slane %v978, %v1209
        %v1211 = vmul.f32 %v1189, %v1198
        %v1212 = vmul.f32 %v1189, %v1202
        %v1213 = vmul.f32 %v1189, %v1206
        %v1214 = vmul.f32 %v1189, %v1210
        %v1215 = vmul.f32 %v1193, %v1198
        %v1216 = vmul.f32 %v1193, %v1202
        %v1217 = vmul.f32 %v1193, %v1206
        %v1218 = vmul.f32 %v1193, %v1210
        %v1219 = vadd.f32 %v1179, %v1211
        %v1220 = vadd.f32 %v1180, %v1212
        %v1221 = vadd.f32 %v1181, %v1213
        %v1222 = vadd.f32 %v1182, %v1214
        %v1223 = vadd.f32 %v1183, %v1215
        %v1224 = vadd.f32 %v1184, %v1216
        %v1225 = vadd.f32 %v1185, %v1217
        %v1226 = vadd.f32 %v1186, %v1218
        %1227 = vset.pattern.permute.xlu0 6
        %1228 = vperm.xlu0 %1227, %v983
        %v1229 = vpop.permute.xlu0 %1228
        %1231 = vset.pattern.permute.xlu0 6
        %1232 = vperm.xlu0 %1231, %v984
        %v1233 = vpop.permute.xlu0 %1232
        %v1235 = vlaneseq
        %v1236 = vshrl.u32 %v1235, 7
        %v1237 = vsub.s32 6, %v1236
        %v1238 = vrot.slane %v975, %v1237
        %v1239 = vlaneseq
        %v1240 = vshrl.u32 %v1239, 7
        %v1241 = vsub.s32 6, %v1240
        %v1242 = vrot.slane %v976, %v1241
        %v1243 = vlaneseq
        %v1244 = vshrl.u32 %v1243, 7
        %v1245 = vsub.s32 6, %v1244
        %v1246 = vrot.slane %v977, %v1245
        %v1247 = vlaneseq
        %v1248 = vshrl.u32 %v1247, 7
        %v1249 = vsub.s32 6, %v1248
        %v1250 = vrot.slane %v978, %v1249
        %v1251 = vmul.f32 %v1229, %v1238
        %v1252 = vmul.f32 %v1229, %v1242
        %v1253 = vmul.f32 %v1229, %v1246
        %v1254 = vmul.f32 %v1229, %v1250
        %v1255 = vmul.f32 %v1233, %v1238
        %v1256 = vmul.f32 %v1233, %v1242
        %v1257 = vmul.f32 %v1233, %v1246
        %v1258 = vmul.f32 %v1233, %v1250
        %v1259 = vadd.f32 %v1219, %v1251
        %v1260 = vadd.f32 %v1220, %v1252
        %v1261 = vadd.f32 %v1221, %v1253
        %v1262 = vadd.f32 %v1222, %v1254
        %v1263 = vadd.f32 %v1223, %v1255
        %v1264 = vadd.f32 %v1224, %v1256
        %v1265 = vadd.f32 %v1225, %v1257
        %v1266 = vadd.f32 %v1226, %v1258
        %1267 = vset.pattern.permute.xlu0 7
        %1268 = vperm.xlu0 %1267, %v983
        %v1269 = vpop.permute.xlu0 %1268
        %1271 = vset.pattern.permute.xlu0 7
        %1272 = vperm.xlu0 %1271, %v984
        %v1273 = vpop.permute.xlu0 %1272
        %v1275 = vlaneseq
        %v1276 = vshrl.u32 %v1275, 7
        %v1277 = vsub.s32 7, %v1276
        %v1278 = vrot.slane %v975, %v1277
        %v1279 = vlaneseq
        %v1280 = vshrl.u32 %v1279, 7
        %v1281 = vsub.s32 7, %v1280
        %v1282 = vrot.slane %v976, %v1281
        %v1283 = vlaneseq
        %v1284 = vshrl.u32 %v1283, 7
        %v1285 = vsub.s32 7, %v1284
        %v1286 = vrot.slane %v977, %v1285
        %v1287 = vlaneseq
        %v1288 = vshrl.u32 %v1287, 7
        %v1289 = vsub.s32 7, %v1288
        %v1290 = vrot.slane %v978, %v1289
        %v1291 = vmul.f32 %v1269, %v1278
        %v1292 = vmul.f32 %v1269, %v1282
        %v1293 = vmul.f32 %v1269, %v1286
        %v1294 = vmul.f32 %v1269, %v1290
        %v1295 = vmul.f32 %v1273, %v1278
        %v1296 = vmul.f32 %v1273, %v1282
        %v1297 = vmul.f32 %v1273, %v1286
        %v1298 = vmul.f32 %v1273, %v1290
        %v1299 = vadd.f32 %v1259, %v1291
        %v1300 = vadd.f32 %v1260, %v1292
        %v1301 = vadd.f32 %v1261, %v1293
        %v1302 = vadd.f32 %v1262, %v1294
        %v1303 = vadd.f32 %v1263, %v1295
        %v1304 = vadd.f32 %v1264, %v1296
        %v1305 = vadd.f32 %v1265, %v1297
        %v1306 = vadd.f32 %v1266, %v1298
        %1307 = vset.pattern.permute.xlu0 8
        %1308 = vperm.xlu0 %1307, %v983
        %v1309 = vpop.permute.xlu0 %1308
        %1311 = vset.pattern.permute.xlu0 8
        %1312 = vperm.xlu0 %1311, %v984
        %v1313 = vpop.permute.xlu0 %1312
        %v1315 = vlaneseq
        %v1316 = vshrl.u32 %v1315, 7
        %v1317 = vsub.s32 0, %v1316
        %v1318 = vrot.slane %v979, %v1317
        %v1319 = vlaneseq
        %v1320 = vshrl.u32 %v1319, 7
        %v1321 = vsub.s32 0, %v1320
        %v1322 = vrot.slane %v980, %v1321
        %v1323 = vlaneseq
        %v1324 = vshrl.u32 %v1323, 7
        %v1325 = vsub.s32 0, %v1324
        %v1326 = vrot.slane %v981, %v1325
        %v1327 = vlaneseq
        %v1328 = vshrl.u32 %v1327, 7
        %v1329 = vsub.s32 0, %v1328
        %v1330 = vrot.slane %v982, %v1329
        %v1331 = vmul.f32 %v1309, %v1318
        %v1332 = vmul.f32 %v1309, %v1322
        %v1333 = vmul.f32 %v1309, %v1326
        %v1334 = vmul.f32 %v1309, %v1330
        %v1335 = vmul.f32 %v1313, %v1318
        %v1336 = vmul.f32 %v1313, %v1322
        %v1337 = vmul.f32 %v1313, %v1326
        %v1338 = vmul.f32 %v1313, %v1330
        %v1339 = vadd.f32 %v1299, %v1331
        %v1340 = vadd.f32 %v1300, %v1332
        %v1341 = vadd.f32 %v1301, %v1333
        %v1342 = vadd.f32 %v1302, %v1334
        %v1343 = vadd.f32 %v1303, %v1335
        %v1344 = vadd.f32 %v1304, %v1336
        %v1345 = vadd.f32 %v1305, %v1337
        %v1346 = vadd.f32 %v1306, %v1338
        %1347 = vset.pattern.permute.xlu0 9
        %1348 = vperm.xlu0 %1347, %v983
        %v1349 = vpop.permute.xlu0 %1348
        %1351 = vset.pattern.permute.xlu0 9
        %1352 = vperm.xlu0 %1351, %v984
        %v1353 = vpop.permute.xlu0 %1352
        %v1355 = vlaneseq
        %v1356 = vshrl.u32 %v1355, 7
        %v1357 = vsub.s32 1, %v1356
        %v1358 = vrot.slane %v979, %v1357
        %v1359 = vlaneseq
        %v1360 = vshrl.u32 %v1359, 7
        %v1361 = vsub.s32 1, %v1360
        %v1362 = vrot.slane %v980, %v1361
        %v1363 = vlaneseq
        %v1364 = vshrl.u32 %v1363, 7
        %v1365 = vsub.s32 1, %v1364
        %v1366 = vrot.slane %v981, %v1365
        %v1367 = vlaneseq
        %v1368 = vshrl.u32 %v1367, 7
        %v1369 = vsub.s32 1, %v1368
        %v1370 = vrot.slane %v982, %v1369
        %v1371 = vmul.f32 %v1349, %v1358
        %v1372 = vmul.f32 %v1349, %v1362
        %v1373 = vmul.f32 %v1349, %v1366
        %v1374 = vmul.f32 %v1349, %v1370
        %v1375 = vmul.f32 %v1353, %v1358
        %v1376 = vmul.f32 %v1353, %v1362
        %v1377 = vmul.f32 %v1353, %v1366
        %v1378 = vmul.f32 %v1353, %v1370
        %v1379 = vadd.f32 %v1339, %v1371
        %v1380 = vadd.f32 %v1340, %v1372
        %v1381 = vadd.f32 %v1341, %v1373
        %v1382 = vadd.f32 %v1342, %v1374
        %v1383 = vadd.f32 %v1343, %v1375
        %v1384 = vadd.f32 %v1344, %v1376
        %v1385 = vadd.f32 %v1345, %v1377
        %v1386 = vadd.f32 %v1346, %v1378
        %v1387 = vmax.f32 %v1379, 0.0
        %v1388 = vmax.f32 %v1380, 0.0
        %v1389 = vmax.f32 %v1381, 0.0
        %v1390 = vmax.f32 %v1382, 0.0
        %v1391 = vmax.f32 %v1383, 0.0
        %v1392 = vmax.f32 %v1384, 0.0
        %v1393 = vmax.f32 %v1385, 0.0
        %v1394 = vmax.f32 %v1386, 0.0
        %1396 = vset.pattern.permute.xlu0 0
        %1397 = vperm.xlu0 %1396, %v372
        %v1398 = vpop.permute.xlu0 %1397
        %1401 = vset.pattern.permute.xlu0 0
        %1402 = vperm.xlu0 %1401, %v373
        %v1403 = vpop.permute.xlu0 %1402
        %v1405 = vmul.f32 %v1387, %v1398
        %v1406 = vmul.f32 %v1388, %v1398
        %v1407 = vmul.f32 %v1389, %v1398
        %v1408 = vmul.f32 %v1390, %v1398
        %v1409 = vmul.f32 %v1391, %v1403
        %v1410 = vmul.f32 %v1392, %v1403
        %v1411 = vmul.f32 %v1393, %v1403
        %v1412 = vmul.f32 %v1394, %v1403
        %vm1413 = vcmask 1041408
        %v1414 = vsel %vm1413, %v1409, 0.0
        %v1415 = vadd.f32 %v1405, %v1414
        %v1416 = vrot.slane %v1415, 4
        %v1417 = vadd.f32 %v1415, %v1416
        %v1418 = vrot.slane %v1417, 2
        %v1419 = vadd.f32 %v1417, %v1418
        %v1420 = vrot.slane %v1419, 1
        %v1421 = vadd.f32 %v1419, %v1420
        %v1422 = vsel %vm1413, %v1410, 0.0
        %v1423 = vadd.f32 %v1406, %v1422
        %v1424 = vrot.slane %v1423, 4
        %v1425 = vadd.f32 %v1423, %v1424
        %v1426 = vrot.slane %v1425, 2
        %v1427 = vadd.f32 %v1425, %v1426
        %v1428 = vrot.slane %v1427, 1
        %v1429 = vadd.f32 %v1427, %v1428
        %v1430 = vsel %vm1413, %v1411, 0.0
        %v1431 = vadd.f32 %v1407, %v1430
        %v1432 = vrot.slane %v1431, 4
        %v1433 = vadd.f32 %v1431, %v1432
        %v1434 = vrot.slane %v1433, 2
        %v1435 = vadd.f32 %v1433, %v1434
        %v1436 = vrot.slane %v1435, 1
        %v1437 = vadd.f32 %v1435, %v1436
        %v1438 = vsel %vm1413, %v1412, 0.0
        %v1439 = vadd.f32 %v1408, %v1438
        %v1440 = vrot.slane %v1439, 4
        %v1441 = vadd.f32 %v1439, %v1440
        %v1442 = vrot.slane %v1441, 2
        %v1443 = vadd.f32 %v1441, %v1442
        %v1444 = vrot.slane %v1443, 1
        %v1445 = vadd.f32 %v1443, %v1444
        %1447 = vset.pattern.permute.xlu0 0
        %1448 = vperm.xlu0 %1447, %v374
        %v1449 = vpop.permute.xlu0 %1448
        %v1451 = vlaneseq
        %v1452 = vshrl.u32 %v1451, 7
        %v1453 = vsub.s32 0, %v1452
        %v1454 = vrot.slane %v1449, %v1453
        %v1455 = vadd.f32 %v1421, %v1454
        %v1456 = vadd.f32 %v1429, %v1454
        %v1457 = vadd.f32 %v1437, %v1454
        %v1458 = vadd.f32 %v1445, %v1454
        %v1463 = vcombine.low %v1455, %v1456
        %v1464 = vcombine.low %v1457, %v1458
        %v1466 = vunpack.c.l.s4 1966171168
        %v1467 = vunpack.c.0.s8 %v1466
        %v1468 = vlaneseq
        %v1469 = vshrl.u32 %v1468, 7
        %v1470 = vsub.s32 %v1467, %v1469
        %v1471 = vrot.slane %v1463, %v1470
        %v1473 = vunpack.c.l.s4 1966171168
        %v1474 = vunpack.c.0.s8 %v1473
        %v1475 = vlaneseq
        %v1476 = vshrl.u32 %v1475, 7
        %v1477 = vsub.s32 %v1474, %v1476
        %v1478 = vrot.slane %v1464, %v1477
        %v1479 = vcombine.low %v1471, %v1478
        %v1481 = vunpack.c.l.s4 1966171168
        %v1482 = vunpack.c.0.s8 %v1481
        %v1483 = vlaneseq
        %v1484 = vshrl.u32 %v1483, 7
        %v1485 = vsub.s32 %v1482, %v1484
        %v1486 = vrot.slane %v1479, %v1485
        %v1488 = vlaneseq
        %vm1489 = vcmp.ge.s32.totalorder %v1488, 0
        %vm1490 = vcmp.lt.s32.totalorder %v1488, 512
        %vm1491 = vmand %vm1489, %vm1490
        %1492 = vst.msk [vmem:[%s328] sm:$0xf] %vm1491, %v1486
        %s1493 = sand.u32 %s227, 1
        %s1494 = scalar_lea.sflag [#allocation4], %s1493
        %s1495 = sand.u32 %s227, 1
        %s1496 = smul.addr %s1495, 4
        %s1497 = scalar_lea.vmem [#allocation3], %s1496
        // Predicated region
        $region57: #{tpu_custom_call.1} parent=55 // pred_check
          %p1498 = pneg %p237
        $region58: #{tpu_custom_call.1} parent=55 // pred_check_branch
          %1500 = sbr.rel (%p1498) target = $region60
        $region59: #{tpu_custom_call.1} parent=55 // pred_region
          %s1501 = smul.u32 4, %s25
          %s1503 = ssub.s32 64, 64
          %1504 = vsyncadd %s1494, %s1503
          %s1505 = smul.addr %s1501, 16
          %s1506 = scalar_lea.hbm %s9, %s1505
          %s1508 = sshll.u32 %s1497, 4
          %s1509 = int_to_ptr.vmem [resolvable:$true] %s1508
          %1511 = dma.vmem_to_hbm [thread:$0]  %s1509, 64, %s1506, %s1494
        $region60: #{tpu_custom_call.1} parent=55 // pred_fallthru
          _
      $region56: #{tpu_custom_call.1} parent=5 // pred_fallthru
        _
      %p1512 = scmp.le.s32.totalorder 2, %s20
      // Predicated region
      $region61: #{tpu_custom_call.1} parent=5 // pred_check
        %p1513 = pneg %p1512
      $region62: #{tpu_custom_call.1} parent=5 // pred_check_branch
        %1515 = sbr.rel (%p1513) target = $region64
      $region63: #{tpu_custom_call.1} parent=5 // pred_region
        %s1516 = ssub.s32 %s20, 2
        // Predicated region
        $region65: #{tpu_custom_call.1} parent=63 // pred_check
          %p1517 = pneg %p243
        $region66: #{tpu_custom_call.1} parent=63 // pred_check_branch
          %1519 = sbr.rel (%p1517) target = $region68
        $region67: #{tpu_custom_call.1} parent=63 // pred_region
          %s1520 = sand.u32 %s228, 1
          %s1521 = scalar_lea.sflag [#allocation4], %s1520
          %s1522 = sand.u32 %s228, 1
          %s1523 = smul.addr %s1522, 4
          %s1524 = scalar_lea.vmem [#allocation3], %s1523
          %1525 = dma.done %s1521, 64
        $region68: #{tpu_custom_call.1} parent=63 // pred_fallthru
          _
      $region64: #{tpu_custom_call.1} parent=5 // pred_fallthru
        _
    $region6: #{tpu_custom_call.1} parent=1 // loop_footer
      %s24 = sadd.s32 1, %s20
    $region7: #{tpu_custom_call.1} parent=1 // loop_footer_branch
      %19 = sbr.rel target = $region3
    $region8: #{tpu_custom_call.1} parent=1 // loop_exit
      _
    %1526 = vsyncpa [#allocation4], 1
    %s1527 = scalar_lea.sflag [#allocation4], 1
    %1528 = vsyncpa %s1527, 1

</llo_original>
